<compile_context>
chip_gen: v7x
topology: tpu7x:2x2x1
jax: 0.10.0
libtpu: 0.0.40
codegen_flags: <defaults>
</compile_context>

<pallas_src>
import functools

import jax
import jax.numpy as jnp
from jax.experimental import pallas as pl
from jax.experimental.pallas import tpu as pltpu


# ---------------------------- fused forward kernel ---------------------------
def _fused_kernel(x_ref, w1t_ref, par1_ref, mwk_ref, wpt_ref, par3_ref,
                  sew1_ref, seb1_ref, sew2t_ref, o_ref,
                  *, KH, KW, PH, PW, W, HW, n_sub, residual):
    x = x_ref[...]                                     # (Cin, n_sub*HW)
    lanes = n_sub * HW

    par1 = par1_ref[...]                               # (C1, 4): b1|a1|bdw|adw
    b1, a1 = par1[:, 0:1], par1[:, 1:2]
    bdw, adw = par1[:, 2:3], par1[:, 3:4]
    par3 = par3_ref[...]                               # (C3, 2): bp|se_b2
    bp, seb2 = par3[:, 0:1], par3[:, 1:2]

    # ---- Conv_block 1: 1x1 conv (BN scale folded into weights) + PReLU ------
    y = jnp.dot(w1t_ref[...], x, preferred_element_type=jnp.float32) + b1
    y = jnp.where(y >= 0.0, y, a1 * y)                 # (C1, lanes)

    # ---- Conv_block 2: depthwise KHxKW conv + (folded) BN + PReLU -----------
    # Each tap = lane roll (XLU) * resident (mask*tap*bn_scale) table (VPU).
    acc = None
    for kh in range(KH):
        for kw in range(KW):
            t = kh * KW + kw
            d = (kh - PH) * W + (kw - PW)              # flat-index shift of tap
            src = y if d == 0 else pltpu.roll(y, (-d) % lanes, axis=1)
            term = src * mwk_ref[t]
            acc = term if acc is None else acc + term
    y = acc + bdw
    y = jnp.where(y >= 0.0, y, adw * y)                # (C2, lanes)

    # ---- Linear_block: 1x1 projection + (folded) BN --------------------------
    y = jnp.dot(wpt_ref[...], y, preferred_element_type=jnp.float32) + bp

    if residual:
        sew1 = sew1_ref[...]                           # (C3, Cm) (se_s1 folded)
        sew2t = sew2t_ref[...]                         # (C3, Cm) (se_s2 folded)
        seb1 = seb1_ref[...]                           # (1, Cm)
        # SE + residual strictly per sample (static 256-aligned lane slices).
        for s in range(n_sub):
            sl = slice(s * HW, (s + 1) * HW)
            ys = y[:, sl]                              # (C3, HW)
            pooled = jnp.mean(ys, axis=1, keepdims=True)              # (C3,1)
            h = jnp.sum(sew1 * pooled, axis=0, keepdims=True) + seb1  # (1,Cm)
            h = jnp.maximum(h, 0.0)
            g = jnp.sum(sew2t * h, axis=1, keepdims=True) + seb2      # (C3,1)
            g = jax.nn.sigmoid(g)
            o_ref[:, sl] = (x[:, sl] + ys * g).astype(o_ref.dtype)
    else:
        o_ref[...] = y.astype(o_ref.dtype)


def _samples_per_step(N):
    """Collapse the batch into one grid step on single-TC chips; keep >=2
    parallel steps on v7x (2 TensorCores)."""
    try:
        kind = jax.devices()[0].device_kind.lower()
    except Exception:
        kind = ""
    cores = 2 if "v7" in kind else 1
    if cores > 1 and N % cores == 0:
        return N // cores
    return N


def depth_wise_se_forward(x_nchw, p, *, residual=True, kernel=(3, 3),
                          stride=(1, 1), padding=(1, 1), samples_per_step=None):
    # TODO(synk): stride-2 downsampling (residual=False config) not in fused path.
    assert stride == (1, 1), "fused kernel supports stride (1,1) only"
    N, Cin, H, W = x_nchw.shape
    HW = H * W
    KH, KW = kernel
    KT = KH * KW
    PH, PW = padding
    C1 = p["w1"].shape[1]
    C2 = p["wdw"].shape[-1]
    C3 = p["wp"].shape[1]
    Cm = p["se_w1"].shape[1]
    assert C1 == C2, "depthwise conv must preserve channel count"
    if residual:
        assert Cin == C3

    n_sub = samples_per_step or _samples_per_step(N)
    assert N % n_sub == 0
    n_tiles = N // n_sub
    lanes = n_sub * HW

    # Channels-major, batch merged into lanes: (Cin, N*HW).  One tiny XLA pass.
    x2 = x_nchw.reshape(N, Cin, HW).transpose(1, 0, 2).reshape(Cin, N * HW)

    col = lambda v: v.reshape(-1, 1)
    row = lambda v: v.reshape(1, -1)

    # Fold BN scales into the preceding weights (exact f32 reassociation).
    w1t_f = p["w1"].T * p["s1"][:, None]              # (C1, Cin)
    wpt_f = p["wp"].T * p["sp"][:, None]              # (C3, C2)
    sew1_f = p["se_w1"] * p["se_s1"][None, :]         # (C3, Cm)
    sew2t_f = p["se_w2"].T * p["se_s2"][:, None]      # (C3, Cm)

    # Packed per-channel columns (fewer, larger DMAs).
    par1 = jnp.stack([p["b1"], p["a1"], p["bdw"], p["adw"]], axis=1)  # (C1,4)
    par3 = jnp.stack([p["bp"], p["se_b2"]], axis=1)                   # (C3,2)

    # Depthwise tables: mask * tap-weight * BN-scale, tiled over the n_sub
    # samples of one lane tile (wrapped rolls land only on masked positions).
    hw = jnp.arange(HW)
    hh, ww = hw // W, hw % W
    mask = jnp.stack([
        ((hh + (kh - PH) >= 0) & (hh + (kh - PH) < H) &
         (ww + (kw - PW) >= 0) & (ww + (kw - PW) < W)).astype(jnp.float32)
        for kh in range(KH) for kw in range(KW)])                      # (KT,HW)
    mask_tiled = jnp.tile(mask, (1, n_sub))                            # (KT,lanes)
    wdw_sc = p["wdw"].reshape(KT, C2) * p["sdw"][None, :]              # (KT,C2)
    mwk = wdw_sc[:, :, None] * mask_tiled[:, None, :]                  # (KT,C2,lanes)

    args = (x2, w1t_f, par1, mwk, wpt_f, par3,
            sew1_f, row(p["se_b1"]), sew2t_f)

    def full_spec(a):
        nd = a.ndim
        return pl.BlockSpec(a.shape, lambda n, _nd=nd: (0,) * _nd)

    in_specs = [pl.BlockSpec((Cin, lanes), lambda n: (0, n))]
    in_specs += [full_spec(a) for a in args[1:]]

    kernel_fn = functools.partial(_fused_kernel, KH=KH, KW=KW, PH=PH, PW=PW,
                                  W=W, HW=HW, n_sub=n_sub, residual=residual)
    out = pl.pallas_call(
        kernel_fn,
        grid=(n_tiles,),
        in_specs=in_specs,
        out_specs=pl.BlockSpec((C3, lanes), lambda n: (0, n)),
        out_shape=jax.ShapeDtypeStruct((C3, N * HW), jnp.float32),
        compiler_params=pltpu.CompilerParams(
            dimension_semantics=("parallel",)),
    )(*args)
    return out.reshape(C3, N, HW).transpose(1, 0, 2).reshape(N, C3, H, W)


# ------------------ pure-JAX reference (for validation) ----------------------
def reference(x_nchw, p, stride, padding, residual=True):
    dn = ("NHWC", "HWIO", "NHWC")
    x = jnp.transpose(x_nchw, (0, 2, 3, 1))
    sc = x
    y = jax.lax.conv_general_dilated(
        x, p["w1"].reshape(1, 1, *p["w1"].shape), (1, 1), "VALID",
        dimension_numbers=dn)
    y = y * p["s1"] + p["b1"]
    y = jnp.where(y >= 0, y, p["a1"] * y)
    C = y.shape[-1]
    y = jax.lax.conv_general_dilated(
        y, p["wdw"].reshape(*p["wdw"].shape[:2], 1, C), stride,
        [(padding[0], padding[0]), (padding[1], padding[1])],
        dimension_numbers=dn, feature_group_count=C)
    y = y * p["sdw"] + p["bdw"]
    y = jnp.where(y >= 0, y, p["adw"] * y)
    y = jax.lax.conv_general_dilated(
        y, p["wp"].reshape(1, 1, *p["wp"].shape), (1, 1), "VALID",
        dimension_numbers=dn)
    y = y * p["sp"] + p["bp"]
    if residual:
        pooled = jnp.mean(y, axis=(1, 2))
        h = jnp.maximum(pooled @ p["se_w1"] * p["se_s1"] + p["se_b1"], 0.0)
        g = jax.nn.sigmoid(h @ p["se_w2"] * p["se_s2"] + p["se_b2"])
        y = sc + y * g[:, None, None, :]
    return jnp.transpose(y, (0, 3, 1, 2))


# ------------------ parameter construction -----------------------------------
def _bn_fold(key, c, eps=1e-5):
    k1, k2, k3, k4 = jax.random.split(key, 4)
    gamma = 1.0 + 0.1 * jax.random.normal(k1, (c,), jnp.float32)
    beta = 0.1 * jax.random.normal(k2, (c,), jnp.float32)
    mean = 0.1 * jax.random.normal(k3, (c,), jnp.float32)
    var = jax.random.uniform(k4, (c,), jnp.float32, 0.5, 1.5)
    scale = gamma / jnp.sqrt(var + eps)
    return scale, beta - mean * scale


def make_params(key, c1, c2, c3, kernel=(3, 3), se_reduct=8):
    c1_in, c1_out = c1
    c2_in, c2_out = c2
    c3_in, c3_out = c3
    cm = c3_out // se_reduct
    ks = jax.random.split(key, 12)
    p = {}
    # Conv_block 1x1
    p["w1"] = 0.1 * jax.random.normal(ks[0], (c1_in, c1_out), jnp.float32)
    p["s1"], p["b1"] = _bn_fold(ks[1], c1_out)
    p["a1"] = 0.25 + 0.05 * jax.random.normal(ks[2], (c1_out,), jnp.float32)
    # Conv_block depthwise (groups = c2_in, c2_out == c2_in)
    p["wdw"] = 0.1 * jax.random.normal(ks[3], (*kernel, c2_out), jnp.float32)
    p["sdw"], p["bdw"] = _bn_fold(ks[4], c2_out)
    p["adw"] = 0.25 + 0.05 * jax.random.normal(ks[5], (c2_out,), jnp.float32)
    # Linear_block 1x1 (project, no activation)
    p["wp"] = 0.1 * jax.random.normal(ks[6], (c3_in, c3_out), jnp.float32)
    p["sp"], p["bp"] = _bn_fold(ks[7], c3_out)
    # SEModule
    p["se_w1"] = 0.1 * jax.random.normal(ks[8], (c3_out, cm), jnp.float32)
    p["se_s1"], p["se_b1"] = _bn_fold(ks[9], cm)
    p["se_w2"] = 0.1 * jax.random.normal(ks[10], (cm, c3_out), jnp.float32)
    p["se_s2"], p["se_b2"] = _bn_fold(ks[11], c3_out)
    return p


if __name__ == "__main__":
    # Depth_Wise_SE(c1=(16,32), c2=(32,32), c3=(32,16), residual=True,
    #               kernel=(3,3), stride=(1,1), padding=(1,1), se_reduct=8)
    N, C_in, H, W = 2, 16, 16, 16
    c1, c2, c3 = (16, 32), (32, 32), (32, 16)
    stride, padding = (1, 1), (1, 1)   # residual=True requires stride 1

    key = jax.random.PRNGKey(0)
    kx, kp = jax.random.split(key)
    x = jax.random.normal(kx, (N, C_in, H, W), jnp.float32)
    params = make_params(kp, c1, c2, c3, kernel=(3, 3), se_reduct=8)

    out = depth_wise_se_forward(x, params, residual=True, kernel=(3, 3),
                                stride=stride, padding=padding)
    out = jax.block_until_ready(out)

    ref = jax.block_until_ready(reference(x, params, stride, padding, True))
    assert out.shape == (N, c3[1], H, W), out.shape
    assert jnp.allclose(out, ref, rtol=1e-4, atol=1e-4), float(
        jnp.max(jnp.abs(out - ref)))

    print("KERNEL_OK")
</pallas_src>

<mosaic_0001>
module attributes {stable_mosaic.version = 11 : i64} {
  func.func @_fused_kernel(%arg0: i32, %arg1: memref<16x512xf32, #tpu.memory_space<vmem>>, %arg2: memref<32x16xf32, #tpu.memory_space<vmem>>, %arg3: memref<32x4xf32, #tpu.memory_space<vmem>>, %arg4: memref<9x32x512xf32, #tpu.memory_space<vmem>>, %arg5: memref<16x32xf32, #tpu.memory_space<vmem>>, %arg6: memref<16x2xf32, #tpu.memory_space<vmem>>, %arg7: memref<16x2xf32, #tpu.memory_space<vmem>>, %arg8: memref<1x2xf32, #tpu.memory_space<vmem>>, %arg9: memref<16x2xf32, #tpu.memory_space<vmem>>, %arg10: memref<16x512xf32, #tpu.memory_space<vmem>>) attributes {dimension_semantics = [#tpu.dimension_semantics<parallel>], iteration_bounds = array<i64: 1>, scalar_prefetch = 0 : i64, scratch_operands = 0 : i64, tpu.core_type = #tpu.core_type<tc>, window_params = [{transform_indices = @transform_0, window_bounds = array<i64: 16, 512>}, {pipeline_mode = #tpu.pipeline_mode<synchronous>, transform_indices = @transform_1, window_bounds = array<i64: 32, 16>}, {pipeline_mode = #tpu.pipeline_mode<synchronous>, transform_indices = @transform_2, window_bounds = array<i64: 32, 4>}, {pipeline_mode = #tpu.pipeline_mode<synchronous>, transform_indices = @transform_3, window_bounds = array<i64: 9, 32, 512>}, {pipeline_mode = #tpu.pipeline_mode<synchronous>, transform_indices = @transform_4, window_bounds = array<i64: 16, 32>}, {pipeline_mode = #tpu.pipeline_mode<synchronous>, transform_indices = @transform_5, window_bounds = array<i64: 16, 2>}, {pipeline_mode = #tpu.pipeline_mode<synchronous>, transform_indices = @transform_6, window_bounds = array<i64: 16, 2>}, {pipeline_mode = #tpu.pipeline_mode<synchronous>, transform_indices = @transform_7, window_bounds = array<i64: 1, 2>}, {pipeline_mode = #tpu.pipeline_mode<synchronous>, transform_indices = @transform_8, window_bounds = array<i64: 16, 2>}, {transform_indices = @transform_9, window_bounds = array<i64: 16, 512>}]} {
    %c0 = arith.constant 0 : index
    %c0_0 = arith.constant 0 : index
    %0 = vector.load %arg1[%c0, %c0_0] : memref<16x512xf32, #tpu.memory_space<vmem>>, vector<16x512xf32>
    %c0_1 = arith.constant 0 : index
    %c0_2 = arith.constant 0 : index
    %1 = vector.load %arg3[%c0_1, %c0_2] : memref<32x4xf32, #tpu.memory_space<vmem>>, vector<32x4xf32>
    %2 = vector.extract_strided_slice %1 {offsets = [0, 0], sizes = [32, 1], strides = [1, 1]} : vector<32x4xf32> to vector<32x1xf32>
    %3 = vector.extract_strided_slice %1 {offsets = [0, 1], sizes = [32, 1], strides = [1, 1]} : vector<32x4xf32> to vector<32x1xf32>
    %4 = vector.extract_strided_slice %1 {offsets = [0, 2], sizes = [32, 1], strides = [1, 1]} : vector<32x4xf32> to vector<32x1xf32>
    %5 = vector.extract_strided_slice %1 {offsets = [0, 3], sizes = [32, 1], strides = [1, 1]} : vector<32x4xf32> to vector<32x1xf32>
    %c0_3 = arith.constant 0 : index
    %c0_4 = arith.constant 0 : index
    %6 = vector.load %arg6[%c0_3, %c0_4] : memref<16x2xf32, #tpu.memory_space<vmem>>, vector<16x2xf32>
    %7 = vector.extract_strided_slice %6 {offsets = [0, 0], sizes = [16, 1], strides = [1, 1]} : vector<16x2xf32> to vector<16x1xf32>
    %8 = vector.extract_strided_slice %6 {offsets = [0, 1], sizes = [16, 1], strides = [1, 1]} : vector<16x2xf32> to vector<16x1xf32>
    %c0_5 = arith.constant 0 : index
    %c0_6 = arith.constant 0 : index
    %9 = vector.load %arg2[%c0_5, %c0_6] : memref<32x16xf32, #tpu.memory_space<vmem>>, vector<32x16xf32>
    %cst = arith.constant dense<0.000000e+00> : vector<32x512xf32>
    %10 = tpu.matmul %9, %0, %cst {dimension_numbers = #tpu.dot_dimension_numbers<[1], [0], [0], [1], [0, 0, 1, 1], [], []>} : vector<32x16xf32>, vector<16x512xf32>, vector<32x512xf32> -> vector<32x512xf32>
    %11 = vector.broadcast %2 : vector<32x1xf32> to vector<32x512xf32>
    %12 = arith.addf %10, %11 : vector<32x512xf32>
    %cst_7 = arith.constant 0.000000e+00 : f32
    %13 = vector.broadcast %cst_7 : f32 to vector<32x512xf32>
    %14 = arith.cmpf oge, %12, %13 : vector<32x512xf32>
    %15 = vector.broadcast %3 : vector<32x1xf32> to vector<32x512xf32>
    %16 = arith.mulf %15, %12 : vector<32x512xf32>
    %17 = arith.select %14, %12, %16 : vector<32x512xi1>, vector<32x512xf32>
    %c17_i32 = arith.constant 17 : i32
    %18 = tpu.dynamic_rotate %17 by %c17_i32 dim 1 : vector<32x512xf32>, i32 -> vector<32x512xf32>
    %c0_8 = arith.constant 0 : index
    %c0_9 = arith.constant 0 : index
    %c0_10 = arith.constant 0 : index
    %19 = vector.load %arg4[%c0_8, %c0_9, %c0_10] : memref<9x32x512xf32, #tpu.memory_space<vmem>>, vector<1x32x512xf32>
    %20 = vector.shape_cast %19 : vector<1x32x512xf32> to vector<32x512xf32>
    %21 = arith.mulf %18, %20 : vector<32x512xf32>
    %c16_i32 = arith.constant 16 : i32
    %22 = tpu.dynamic_rotate %17 by %c16_i32 dim 1 : vector<32x512xf32>, i32 -> vector<32x512xf32>
    %c1 = arith.constant 1 : index
    %c0_11 = arith.constant 0 : index
    %c0_12 = arith.constant 0 : index
    %23 = vector.load %arg4[%c1, %c0_11, %c0_12] : memref<9x32x512xf32, #tpu.memory_space<vmem>>, vector<1x32x512xf32>
    %24 = vector.shape_cast %23 : vector<1x32x512xf32> to vector<32x512xf32>
    %25 = arith.mulf %22, %24 : vector<32x512xf32>
    %26 = arith.addf %21, %25 : vector<32x512xf32>
    %c15_i32 = arith.constant 15 : i32
    %27 = tpu.dynamic_rotate %17 by %c15_i32 dim 1 : vector<32x512xf32>, i32 -> vector<32x512xf32>
    %c2 = arith.constant 2 : index
    %c0_13 = arith.constant 0 : index
    %c0_14 = arith.constant 0 : index
    %28 = vector.load %arg4[%c2, %c0_13, %c0_14] : memref<9x32x512xf32, #tpu.memory_space<vmem>>, vector<1x32x512xf32>
    %29 = vector.shape_cast %28 : vector<1x32x512xf32> to vector<32x512xf32>
    %30 = arith.mulf %27, %29 : vector<32x512xf32>
    %31 = arith.addf %26, %30 : vector<32x512xf32>
    %c1_i32 = arith.constant 1 : i32
    %32 = tpu.dynamic_rotate %17 by %c1_i32 dim 1 : vector<32x512xf32>, i32 -> vector<32x512xf32>
    %c3 = arith.constant 3 : index
    %c0_15 = arith.constant 0 : index
    %c0_16 = arith.constant 0 : index
    %33 = vector.load %arg4[%c3, %c0_15, %c0_16] : memref<9x32x512xf32, #tpu.memory_space<vmem>>, vector<1x32x512xf32>
    %34 = vector.shape_cast %33 : vector<1x32x512xf32> to vector<32x512xf32>
    %35 = arith.mulf %32, %34 : vector<32x512xf32>
    %36 = arith.addf %31, %35 : vector<32x512xf32>
    %c4 = arith.constant 4 : index
    %c0_17 = arith.constant 0 : index
    %c0_18 = arith.constant 0 : index
    %37 = vector.load %arg4[%c4, %c0_17, %c0_18] : memref<9x32x512xf32, #tpu.memory_space<vmem>>, vector<1x32x512xf32>
    %38 = vector.shape_cast %37 : vector<1x32x512xf32> to vector<32x512xf32>
    %39 = arith.mulf %17, %38 : vector<32x512xf32>
    %40 = arith.addf %36, %39 : vector<32x512xf32>
    %c511_i32 = arith.constant 511 : i32
    %41 = tpu.dynamic_rotate %17 by %c511_i32 dim 1 : vector<32x512xf32>, i32 -> vector<32x512xf32>
    %c5 = arith.constant 5 : index
    %c0_19 = arith.constant 0 : index
    %c0_20 = arith.constant 0 : index
    %42 = vector.load %arg4[%c5, %c0_19, %c0_20] : memref<9x32x512xf32, #tpu.memory_space<vmem>>, vector<1x32x512xf32>
    %43 = vector.shape_cast %42 : vector<1x32x512xf32> to vector<32x512xf32>
    %44 = arith.mulf %41, %43 : vector<32x512xf32>
    %45 = arith.addf %40, %44 : vector<32x512xf32>
    %c497_i32 = arith.constant 497 : i32
    %46 = tpu.dynamic_rotate %17 by %c497_i32 dim 1 : vector<32x512xf32>, i32 -> vector<32x512xf32>
    %c6 = arith.constant 6 : index
    %c0_21 = arith.constant 0 : index
    %c0_22 = arith.constant 0 : index
    %47 = vector.load %arg4[%c6, %c0_21, %c0_22] : memref<9x32x512xf32, #tpu.memory_space<vmem>>, vector<1x32x512xf32>
    %48 = vector.shape_cast %47 : vector<1x32x512xf32> to vector<32x512xf32>
    %49 = arith.mulf %46, %48 : vector<32x512xf32>
    %50 = arith.addf %45, %49 : vector<32x512xf32>
    %c496_i32 = arith.constant 496 : i32
    %51 = tpu.dynamic_rotate %17 by %c496_i32 dim 1 : vector<32x512xf32>, i32 -> vector<32x512xf32>
    %c7 = arith.constant 7 : index
    %c0_23 = arith.constant 0 : index
    %c0_24 = arith.constant 0 : index
    %52 = vector.load %arg4[%c7, %c0_23, %c0_24] : memref<9x32x512xf32, #tpu.memory_space<vmem>>, vector<1x32x512xf32>
    %53 = vector.shape_cast %52 : vector<1x32x512xf32> to vector<32x512xf32>
    %54 = arith.mulf %51, %53 : vector<32x512xf32>
    %55 = arith.addf %50, %54 : vector<32x512xf32>
    %c495_i32 = arith.constant 495 : i32
    %56 = tpu.dynamic_rotate %17 by %c495_i32 dim 1 : vector<32x512xf32>, i32 -> vector<32x512xf32>
    %c8 = arith.constant 8 : index
    %c0_25 = arith.constant 0 : index
    %c0_26 = arith.constant 0 : index
    %57 = vector.load %arg4[%c8, %c0_25, %c0_26] : memref<9x32x512xf32, #tpu.memory_space<vmem>>, vector<1x32x512xf32>
    %58 = vector.shape_cast %57 : vector<1x32x512xf32> to vector<32x512xf32>
    %59 = arith.mulf %56, %58 : vector<32x512xf32>
    %60 = arith.addf %55, %59 : vector<32x512xf32>
    %61 = vector.broadcast %4 : vector<32x1xf32> to vector<32x512xf32>
    %62 = arith.addf %60, %61 : vector<32x512xf32>
    %cst_27 = arith.constant 0.000000e+00 : f32
    %63 = vector.broadcast %cst_27 : f32 to vector<32x512xf32>
    %64 = arith.cmpf oge, %62, %63 : vector<32x512xf32>
    %65 = vector.broadcast %5 : vector<32x1xf32> to vector<32x512xf32>
    %66 = arith.mulf %65, %62 : vector<32x512xf32>
    %67 = arith.select %64, %62, %66 : vector<32x512xi1>, vector<32x512xf32>
    %c0_28 = arith.constant 0 : index
    %c0_29 = arith.constant 0 : index
    %68 = vector.load %arg5[%c0_28, %c0_29] : memref<16x32xf32, #tpu.memory_space<vmem>>, vector<16x32xf32>
    %cst_30 = arith.constant dense<0.000000e+00> : vector<16x512xf32>
    %69 = tpu.matmul %68, %67, %cst_30 {dimension_numbers = #tpu.dot_dimension_numbers<[1], [0], [0], [1], [0, 0, 1, 1], [], []>} : vector<16x32xf32>, vector<32x512xf32>, vector<16x512xf32> -> vector<16x512xf32>
    %70 = vector.broadcast %7 : vector<16x1xf32> to vector<16x512xf32>
    %71 = arith.addf %69, %70 : vector<16x512xf32>
    %c0_31 = arith.constant 0 : index
    %c0_32 = arith.constant 0 : index
    %72 = vector.load %arg7[%c0_31, %c0_32] : memref<16x2xf32, #tpu.memory_space<vmem>>, vector<16x2xf32>
    %c0_33 = arith.constant 0 : index
    %c0_34 = arith.constant 0 : index
    %73 = vector.load %arg9[%c0_33, %c0_34] : memref<16x2xf32, #tpu.memory_space<vmem>>, vector<16x2xf32>
    %c0_35 = arith.constant 0 : index
    %c0_36 = arith.constant 0 : index
    %74 = vector.load %arg8[%c0_35, %c0_36] : memref<1x2xf32, #tpu.memory_space<vmem>>, vector<1x2xf32>
    %75 = vector.extract_strided_slice %71 {offsets = [0, 0], sizes = [16, 256], strides = [1, 1]} : vector<16x512xf32> to vector<16x256xf32>
    %cst_37 = arith.constant dense<0.000000e+00> : vector<16xf32>
    %76 = vector.multi_reduction <add>, %75, %cst_37 [1] : vector<16x256xf32> to vector<16xf32>
    %77 = vector.shape_cast %76 : vector<16xf32> to vector<16x1xf32>
    %cst_38 = arith.constant 2.560000e+02 : f32
    %78 = vector.broadcast %cst_38 : f32 to vector<16x1xf32>
    %79 = arith.divf %77, %78 : vector<16x1xf32>
    %80 = vector.broadcast %79 : vector<16x1xf32> to vector<16x2xf32>
    %81 = arith.mulf %72, %80 : vector<16x2xf32>
    %cst_39 = arith.constant dense<0.000000e+00> : vector<2xf32>
    %82 = vector.multi_reduction <add>, %81, %cst_39 [0] : vector<16x2xf32> to vector<2xf32>
    %83 = vector.shape_cast %82 : vector<2xf32> to vector<1x2xf32>
    %84 = arith.addf %83, %74 : vector<1x2xf32>
    %cst_40 = arith.constant 0.000000e+00 : f32
    %85 = vector.broadcast %cst_40 : f32 to vector<1x2xf32>
    %86 = arith.maximumf %84, %85 : vector<1x2xf32>
    %87 = vector.broadcast %86 : vector<1x2xf32> to vector<16x2xf32>
    %88 = arith.mulf %73, %87 : vector<16x2xf32>
    %cst_41 = arith.constant dense<0.000000e+00> : vector<16xf32>
    %89 = vector.multi_reduction <add>, %88, %cst_41 [1] : vector<16x2xf32> to vector<16xf32>
    %90 = vector.shape_cast %89 : vector<16xf32> to vector<16x1xf32>
    %91 = arith.addf %90, %8 : vector<16x1xf32>
    %92 = arith.negf %91 : vector<16x1xf32>
    %93 = math.exp %92 : vector<16x1xf32>
    %cst_42 = arith.constant 1.000000e+00 : f32
    %94 = vector.broadcast %cst_42 : f32 to vector<16x1xf32>
    %95 = arith.addf %94, %93 : vector<16x1xf32>
    %96 = arith.divf %94, %95 : vector<16x1xf32>
    %97 = vector.extract_strided_slice %0 {offsets = [0, 0], sizes = [16, 256], strides = [1, 1]} : vector<16x512xf32> to vector<16x256xf32>
    %98 = vector.broadcast %96 : vector<16x1xf32> to vector<16x256xf32>
    %99 = arith.mulf %75, %98 : vector<16x256xf32>
    %100 = arith.addf %97, %99 : vector<16x256xf32>
    %c0_43 = arith.constant 0 : index
    %c0_44 = arith.constant 0 : index
    %101 = vector.load %arg10[%c0_43, %c0_44] : memref<16x512xf32, #tpu.memory_space<vmem>>, vector<16x256xf32>
    tpu.vector_store %arg10[%c0_43, %c0_44], %100 {strides = array<i32>} : memref<16x512xf32, #tpu.memory_space<vmem>>, vector<16x256xf32>,
    %102 = vector.extract_strided_slice %71 {offsets = [0, 256], sizes = [16, 256], strides = [1, 1]} : vector<16x512xf32> to vector<16x256xf32>
    %cst_45 = arith.constant dense<0.000000e+00> : vector<16xf32>
    %103 = vector.multi_reduction <add>, %102, %cst_45 [1] : vector<16x256xf32> to vector<16xf32>
    %104 = vector.shape_cast %103 : vector<16xf32> to vector<16x1xf32>
    %cst_46 = arith.constant 2.560000e+02 : f32
    %105 = vector.broadcast %cst_46 : f32 to vector<16x1xf32>
    %106 = arith.divf %104, %105 : vector<16x1xf32>
    %107 = vector.broadcast %106 : vector<16x1xf32> to vector<16x2xf32>
    %108 = arith.mulf %72, %107 : vector<16x2xf32>
    %cst_47 = arith.constant dense<0.000000e+00> : vector<2xf32>
    %109 = vector.multi_reduction <add>, %108, %cst_47 [0] : vector<16x2xf32> to vector<2xf32>
    %110 = vector.shape_cast %109 : vector<2xf32> to vector<1x2xf32>
    %111 = arith.addf %110, %74 : vector<1x2xf32>
    %cst_48 = arith.constant 0.000000e+00 : f32
    %112 = vector.broadcast %cst_48 : f32 to vector<1x2xf32>
    %113 = arith.maximumf %111, %112 : vector<1x2xf32>
    %114 = vector.broadcast %113 : vector<1x2xf32> to vector<16x2xf32>
    %115 = arith.mulf %73, %114 : vector<16x2xf32>
    %cst_49 = arith.constant dense<0.000000e+00> : vector<16xf32>
    %116 = vector.multi_reduction <add>, %115, %cst_49 [1] : vector<16x2xf32> to vector<16xf32>
    %117 = vector.shape_cast %116 : vector<16xf32> to vector<16x1xf32>
    %118 = arith.addf %117, %8 : vector<16x1xf32>
    %119 = arith.negf %118 : vector<16x1xf32>
    %120 = math.exp %119 : vector<16x1xf32>
    %cst_50 = arith.constant 1.000000e+00 : f32
    %121 = vector.broadcast %cst_50 : f32 to vector<16x1xf32>
    %122 = arith.addf %121, %120 : vector<16x1xf32>
    %123 = arith.divf %121, %122 : vector<16x1xf32>
    %124 = vector.extract_strided_slice %0 {offsets = [0, 256], sizes = [16, 256], strides = [1, 1]} : vector<16x512xf32> to vector<16x256xf32>
    %125 = vector.broadcast %123 : vector<16x1xf32> to vector<16x256xf32>
    %126 = arith.mulf %102, %125 : vector<16x256xf32>
    %127 = arith.addf %124, %126 : vector<16x256xf32>
    %c0_51 = arith.constant 0 : index
    %c256 = arith.constant 256 : index
    %128 = vector.load %arg10[%c0_51, %c256] : memref<16x512xf32, #tpu.memory_space<vmem>>, vector<16x256xf32>
    tpu.vector_store %arg10[%c0_51, %c256], %127 {strides = array<i32>} : memref<16x512xf32, #tpu.memory_space<vmem>>, vector<16x256xf32>,
    return
  }
  func.func @transform_0(%arg0: i32) -> (i32, i32) {
    %c0_i32 = arith.constant 0 : i32
    %c0_i32_0 = arith.constant 0 : i32
    return %c0_i32, %arg0 : i32, i32
  }
  func.func @transform_1(%arg0: i32) -> (i32, i32) {
    %c0_i32 = arith.constant 0 : i32
    %c0_i32_0 = arith.constant 0 : i32
    %c0_i32_1 = arith.constant 0 : i32
    return %c0_i32, %c0_i32_0 : i32, i32
  }
  func.func @transform_2(%arg0: i32) -> (i32, i32) {
    %c0_i32 = arith.constant 0 : i32
    %c0_i32_0 = arith.constant 0 : i32
    %c0_i32_1 = arith.constant 0 : i32
    return %c0_i32, %c0_i32_0 : i32, i32
  }
  func.func @transform_3(%arg0: i32) -> (i32, i32, i32) {
    %c0_i32 = arith.constant 0 : i32
    %c0_i32_0 = arith.constant 0 : i32
    %c0_i32_1 = arith.constant 0 : i32
    %c0_i32_2 = arith.constant 0 : i32
    return %c0_i32, %c0_i32_0, %c0_i32_1 : i32, i32, i32
  }
  func.func @transform_4(%arg0: i32) -> (i32, i32) {
    %c0_i32 = arith.constant 0 : i32
    %c0_i32_0 = arith.constant 0 : i32
    %c0_i32_1 = arith.constant 0 : i32
    return %c0_i32, %c0_i32_0 : i32, i32
  }
  func.func @transform_5(%arg0: i32) -> (i32, i32) {
    %c0_i32 = arith.constant 0 : i32
    %c0_i32_0 = arith.constant 0 : i32
    %c0_i32_1 = arith.constant 0 : i32
    return %c0_i32, %c0_i32_0 : i32, i32
  }
  func.func @transform_6(%arg0: i32) -> (i32, i32) {
    %c0_i32 = arith.constant 0 : i32
    %c0_i32_0 = arith.constant 0 : i32
    %c0_i32_1 = arith.constant 0 : i32
    return %c0_i32, %c0_i32_0 : i32, i32
  }
  func.func @transform_7(%arg0: i32) -> (i32, i32) {
    %c0_i32 = arith.constant 0 : i32
    %c0_i32_0 = arith.constant 0 : i32
    %c0_i32_1 = arith.constant 0 : i32
    return %c0_i32, %c0_i32_0 : i32, i32
  }
  func.func @transform_8(%arg0: i32) -> (i32, i32) {
    %c0_i32 = arith.constant 0 : i32
    %c0_i32_0 = arith.constant 0 : i32
    %c0_i32_1 = arith.constant 0 : i32
    return %c0_i32, %c0_i32_0 : i32, i32
  }
  func.func @transform_9(%arg0: i32) -> (i32, i32) {
    %c0_i32 = arith.constant 0 : i32
    %c0_i32_0 = arith.constant 0 : i32
    return %c0_i32, %arg0 : i32, i32
  }
}

</mosaic_0001>

<llo_original>
// kernel: tpu_custom_call.1
$region0: #{tpu_custom_call.1}
  #allocation0 [shape = 'u32[]', space=smem, size = 0x4, offset = 0x4, fixed_abs, tag = 'smem constant byte address 0x4 - core index']
  #allocation1 [shape = 'u32[144,128]{1,0:T(1,128)}', space=vmem, size = 0x12000, scoped, tag = 'internal scratch']
  %s0 = inlined_call_operand.vmem [shape: f32[16,512], index: 0, kind: input, shape index: {}]
  %s1 = inlined_call_operand.vmem [shape: f32[32,16], index: 1, kind: input, shape index: {}]
  %s2 = inlined_call_operand.vmem [shape: f32[32,4], index: 2, kind: input, shape index: {}]
  %s3 = inlined_call_operand.hbm [shape: f32[9,32,512], index: 3, kind: input, shape index: {}]
  %s4 = inlined_call_operand.vmem [shape: f32[16,32], index: 4, kind: input, shape index: {}]
  %s5 = inlined_call_operand.vmem [shape: f32[16,2], index: 5, kind: input, shape index: {}]
  %s6 = inlined_call_operand.vmem [shape: f32[16,2], index: 6, kind: input, shape index: {}]
  %s7 = inlined_call_operand.vmem [shape: f32[1,2], index: 7, kind: input, shape index: {}]
  %s8 = inlined_call_operand.vmem [shape: f32[16,2], index: 8, kind: input, shape index: {}]
  %s9 = inlined_call_operand.hbm [shape: f32[16,512], index: 9, kind: output, shape index: {}]
  %s10 = sld [smem:[#allocation0]]
  $region50: #{tpu_custom_call.1} parent=0
    _
  %s12 = ssub.s32 1, %s10
  %s13 = scalar_select 0, %s12, %s10
  $region1: #{tpu_custom_call.1} parent=0
    #allocation2 [shape = 'u8[589824]{0}', space=vmem, size = 0x90000, scoped, tag = 'input window, operand 3, single buffered']
    #allocation3 [shape = 's32[1]{0}', space=sflag, size = 0x4, scoped, tag = 'scoped memory for tpu_custom_call.1']
    #allocation4 [shape = 's32[1]{0}', space=sflag, size = 0x4, scoped, tag = 'scoped memory for tpu_custom_call.1']
    #allocation5 [shape = 'u8[32768]{0}', space=vmem, size = 0x8000, scoped, tag = 'output window, operand 0, single buffered']
    %14 = vsyncpa [#allocation3], 0
    %15 = vsyncpa [#allocation4], 0
    // Predicated region
    $region2: #{tpu_custom_call.1} parent=1 // pred_check
      _
    $region3: #{tpu_custom_call.1} parent=1 // pred_check_branch
      %17 = sbr.rel (0) target = $region5
    $region4: #{tpu_custom_call.1} parent=1 // pred_region
      _
    $region5: #{tpu_custom_call.1} parent=1 // pred_fallthru
      _
    // Predicated region
    $region6: #{tpu_custom_call.1} parent=1 // pred_check
      _
    $region7: #{tpu_custom_call.1} parent=1 // pred_check_branch
      %19 = sbr.rel (0) target = $region9
    $region8: #{tpu_custom_call.1} parent=1 // pred_region
      _
    $region9: #{tpu_custom_call.1} parent=1 // pred_fallthru
      _
    // Predicated region
    $region10: #{tpu_custom_call.1} parent=1 // pred_check
      _
    $region11: #{tpu_custom_call.1} parent=1 // pred_check_branch
      %21 = sbr.rel (0) target = $region13
    $region12: #{tpu_custom_call.1} parent=1 // pred_region
      _
    $region13: #{tpu_custom_call.1} parent=1 // pred_fallthru
      _
    // Predicated region
    $region14: #{tpu_custom_call.1} parent=1 // pred_check
      _
    $region15: #{tpu_custom_call.1} parent=1 // pred_check_branch
      %23 = sbr.rel (0) target = $region17
    $region16: #{tpu_custom_call.1} parent=1 // pred_region
      %s25 = ssub.s32 18432, 18432
      %26 = vsyncadd [#allocation3], %s25
      %s27 = sshll.u32 [#allocation2], 4
      %s28 = int_to_ptr.vmem [resolvable:$true] %s27
      %33 = dma.hbm_to_vmem [thread:$0]  %s3, 18432, %s28, [#allocation3], 512, 512, 32
    $region17: #{tpu_custom_call.1} parent=1 // pred_fallthru
      _
    // Predicated region
    $region18: #{tpu_custom_call.1} parent=1 // pred_check
      _
    $region19: #{tpu_custom_call.1} parent=1 // pred_check_branch
      %35 = sbr.rel (0) target = $region21
    $region20: #{tpu_custom_call.1} parent=1 // pred_region
      _
    $region21: #{tpu_custom_call.1} parent=1 // pred_fallthru
      _
    // Predicated region
    $region22: #{tpu_custom_call.1} parent=1 // pred_check
      _
    $region23: #{tpu_custom_call.1} parent=1 // pred_check_branch
      %37 = sbr.rel (0) target = $region25
    $region24: #{tpu_custom_call.1} parent=1 // pred_region
      _
    $region25: #{tpu_custom_call.1} parent=1 // pred_fallthru
      _
    // Predicated region
    $region26: #{tpu_custom_call.1} parent=1 // pred_check
      _
    $region27: #{tpu_custom_call.1} parent=1 // pred_check_branch
      %39 = sbr.rel (0) target = $region29
    $region28: #{tpu_custom_call.1} parent=1 // pred_region
      _
    $region29: #{tpu_custom_call.1} parent=1 // pred_fallthru
      _
    // Predicated region
    $region30: #{tpu_custom_call.1} parent=1 // pred_check
      _
    $region31: #{tpu_custom_call.1} parent=1 // pred_check_branch
      %41 = sbr.rel (0) target = $region33
    $region32: #{tpu_custom_call.1} parent=1 // pred_region
      _
    $region33: #{tpu_custom_call.1} parent=1 // pred_fallthru
      _
    // Predicated region
    $region34: #{tpu_custom_call.1} parent=1 // pred_check
      _
    $region35: #{tpu_custom_call.1} parent=1 // pred_check_branch
      %43 = sbr.rel (0) target = $region37
    $region36: #{tpu_custom_call.1} parent=1 // pred_region
      _
    $region37: #{tpu_custom_call.1} parent=1 // pred_fallthru
      _
    // Predicated region
    $region38: #{tpu_custom_call.1} parent=1 // pred_check
      _
    $region39: #{tpu_custom_call.1} parent=1 // pred_check_branch
      %45 = sbr.rel (0) target = $region41
    $region40: #{tpu_custom_call.1} parent=1 // pred_region
      %46 = dma.done [#allocation3], 18432
    $region41: #{tpu_custom_call.1} parent=1 // pred_fallthru
      _
    %v47 = vld [vmem:[%s0] sm:$0xff]
    %v48 = vld [vmem:[%s0 + $0x8] sm:$0xff]
    %v49 = vld [vmem:[%s0 + $0x10] sm:$0xff]
    %v50 = vld [vmem:[%s0 + $0x18] sm:$0xff]
    %v51 = vld [vmem:[%s0 + $0x20] sm:$0xff]
    %v52 = vld [vmem:[%s0 + $0x28] sm:$0xff]
    %v53 = vld [vmem:[%s0 + $0x30] sm:$0xff]
    %v54 = vld [vmem:[%s0 + $0x38] sm:$0xff]
    %v55 = vld [vmem:[%s2] sm:$0xff]
    %v56 = vld [vmem:[%s2 + $0x8] sm:$0xff]
    %v57 = vld [vmem:[%s2 + $0x10] sm:$0xff]
    %v58 = vld [vmem:[%s2 + $0x18] sm:$0xff]
    %v59 = vld [vmem:[%s5] sm:$0xff]
    %v60 = vld [vmem:[%s5 + $0x8] sm:$0xff]
    %v61 = vld [vmem:[%s1] sm:$0xff]
    %v62 = vld [vmem:[%s1 + $0x8] sm:$0xff]
    %v63 = vld [vmem:[%s1 + $0x10] sm:$0xff]
    %v64 = vld [vmem:[%s1 + $0x18] sm:$0xff]
    %66 = vset.pattern.permute.xlu0 0
    %67 = vperm.xlu0 %66, %v55
    %v68 = vpop.permute.xlu0 %67
    %71 = vset.pattern.permute.xlu0 0
    %72 = vperm.xlu0 %71, %v56
    %v73 = vpop.permute.xlu0 %72
    %76 = vset.pattern.permute.xlu0 0
    %77 = vperm.xlu0 %76, %v57
    %v78 = vpop.permute.xlu0 %77
    %81 = vset.pattern.permute.xlu0 0
    %82 = vperm.xlu0 %81, %v58
    %v83 = vpop.permute.xlu0 %82
    %vm85 = vcmask 130048
    %v87 = vsel %vm85, %v61, 0
    %v90 = vsel %vm85, %v62, 0
    %v93 = vsel %vm85, %v63, 0
    %v96 = vsel %vm85, %v64, 0
    %98 = vmatprep.subr.mxu0 %v48
    %99 = vmatpush1.msra.mxu0 %v47
    %100 = vmatprep.subr.mxu0 %v52
    %101 = vmatpush1.msra.mxu0 %v51
    %102 = vmatprep.subr.mxu0 0.0
    %103 = vmatpush1.msra.mxu0 0.0
    %104 = vmatprep.subr.mxu0 0.0
    %105 = vmatpush1.msra.mxu0 0.0
    %106 = vmatprep.subr.mxu0 0.0
    %107 = vmatpush1.msra.mxu0 0.0
    %108 = vmatprep.subr.mxu0 0.0
    %109 = vmatpush1.msra.mxu0 0.0
    %110 = vmatprep.subr.mxu0 0.0
    %111 = vmatpush1.msra.mxu0 0.0
    %112 = vmatprep.subr.mxu0 0.0
    %113 = vmatpush1.msra.mxu0 0.0
    %114 = vmatprep.subr.mxu0 0.0
    %115 = vmatpush1.msra.mxu0 0.0
    %116 = vmatprep.subr.mxu0 0.0
    %117 = vmatpush1.msra.mxu0 0.0
    %118 = vmatprep.subr.mxu0 0.0
    %119 = vmatpush1.msra.mxu0 0.0
    %120 = vmatprep.subr.mxu0 0.0
    %121 = vmatpush1.msra.mxu0 0.0
    %122 = vmatprep.subr.mxu0 0.0
    %123 = vmatpush1.msra.mxu0 0.0
    %124 = vmatprep.subr.mxu0 0.0
    %125 = vmatpush1.msra.mxu0 0.0
    %126 = vmatprep.subr.mxu0 0.0
    %127 = vmatpush1.msra.mxu0 0.0
    %128 = vmatprep.subr.mxu0 0.0
    %129 = vmatpush1.msra.mxu0 0.0
    %130 = vmatprep.subr.mxu0 0.0
    %131 = vmatpush1.msra.mxu0 0.0
    %132 = vmatprep.subr.mxu0 0.0
    %133 = vmatpush1.msra.mxu0 0.0
    %134 = vmatprep.subr.mxu0 0.0
    %135 = vmatpush1.msra.mxu0 0.0
    %136 = vmatprep.subr.mxu0 0.0
    %137 = vmatpush1.msra.mxu0 0.0
    %138 = vmatprep.subr.mxu0 0.0
    %139 = vmatpush1.msra.mxu0 0.0
    %140 = vmatprep.subr.mxu0 0.0
    %141 = vmatpush1.msra.mxu0 0.0
    %142 = vmatprep.subr.mxu0 0.0
    %143 = vmatpush1.msra.mxu0 0.0
    %144 = vmatprep.subr.mxu0 0.0
    %145 = vmatpush1.msra.mxu0 0.0
    %146 = vmatprep.subr.mxu0 0.0
    %147 = vmatpush1.msra.mxu0 0.0
    %148 = vmatprep.subr.mxu0 0.0
    %149 = vmatpush1.msra.mxu0 0.0
    %150 = vmatprep.subr.mxu0 0.0
    %151 = vmatpush1.msra.mxu0 0.0
    %152 = vmatprep.subr.mxu0 0.0
    %153 = vmatpush1.msra.mxu0 0.0
    %154 = vmatprep.subr.mxu0 0.0
    %155 = vmatpush1.msra.mxu0 0.0
    %156 = vmatprep.subr.mxu0 0.0
    %157 = vmatpush1.msra.mxu0 0.0
    %158 = vmatprep.subr.mxu0 0.0
    %159 = vmatpush1.msra.mxu0 0.0
    %160 = vmatprep.subr.mxu0 0.0
    %161 = vmatpush1.msra.mxu0 0.0
    %162 = vmatprep.mubr.f32.mxu0 0.0
    %163 = vmatmul.mubr.f32.gmra.mrb[0].mxu0 %v87
    %v164 = vpop.f32.mrb[0].mxu0
    %v165 = vadd.f32 %v68, %v164
    %v166 = vpop.f32.mrb[0].mxu0
    %v167 = vadd.f32 %v68, %v166
    %168 = vmatprep.mubr.f32.mxu0 0.0
    %169 = vmatmul.mubr.f32.gmra.mrb[0].mxu0 %v90
    %v170 = vpop.f32.mrb[0].mxu0
    %v171 = vadd.f32 %v73, %v170
    %v172 = vpop.f32.mrb[0].mxu0
    %v173 = vadd.f32 %v73, %v172
    %174 = vmatprep.mubr.f32.mxu0 0.0
    %175 = vmatmul.mubr.f32.gmra.mrb[0].mxu0 %v93
    %v176 = vpop.f32.mrb[0].mxu0
    %v177 = vadd.f32 %v78, %v176
    %v178 = vpop.f32.mrb[0].mxu0
    %v179 = vadd.f32 %v78, %v178
    %180 = vmatprep.mubr.f32.mxu0 0.0
    %181 = vmatmul.mubr.f32.gmra.mrb[0].mxu0 %v96
    %v182 = vpop.f32.mrb[0].mxu0
    %v183 = vadd.f32 %v83, %v182
    %v184 = vpop.f32.mrb[0].mxu0
    %v185 = vadd.f32 %v83, %v184
    %186 = vdwg.mxu0
    %187 = vmatprep.subr.mxu0 %v50
    %188 = vmatpush1.msra.mxu0 %v49
    %189 = vmatprep.subr.mxu0 %v54
    %190 = vmatpush1.msra.mxu0 %v53
    %191 = vmatprep.subr.mxu0 0.0
    %192 = vmatpush1.msra.mxu0 0.0
    %193 = vmatprep.subr.mxu0 0.0
    %194 = vmatpush1.msra.mxu0 0.0
    %195 = vmatprep.subr.mxu0 0.0
    %196 = vmatpush1.msra.mxu0 0.0
    %197 = vmatprep.subr.mxu0 0.0
    %198 = vmatpush1.msra.mxu0 0.0
    %199 = vmatprep.subr.mxu0 0.0
    %200 = vmatpush1.msra.mxu0 0.0
    %201 = vmatprep.subr.mxu0 0.0
    %202 = vmatpush1.msra.mxu0 0.0
    %203 = vmatprep.subr.mxu0 0.0
    %204 = vmatpush1.msra.mxu0 0.0
    %205 = vmatprep.subr.mxu0 0.0
    %206 = vmatpush1.msra.mxu0 0.0
    %207 = vmatprep.subr.mxu0 0.0
    %208 = vmatpush1.msra.mxu0 0.0
    %209 = vmatprep.subr.mxu0 0.0
    %210 = vmatpush1.msra.mxu0 0.0
    %211 = vmatprep.subr.mxu0 0.0
    %212 = vmatpush1.msra.mxu0 0.0
    %213 = vmatprep.subr.mxu0 0.0
    %214 = vmatpush1.msra.mxu0 0.0
    %215 = vmatprep.subr.mxu0 0.0
    %216 = vmatpush1.msra.mxu0 0.0
    %217 = vmatprep.subr.mxu0 0.0
    %218 = vmatpush1.msra.mxu0 0.0
    %219 = vmatprep.subr.mxu0 0.0
    %220 = vmatpush1.msra.mxu0 0.0
    %221 = vmatprep.subr.mxu0 0.0
    %222 = vmatpush1.msra.mxu0 0.0
    %223 = vmatprep.subr.mxu0 0.0
    %224 = vmatpush1.msra.mxu0 0.0
    %225 = vmatprep.subr.mxu0 0.0
    %226 = vmatpush1.msra.mxu0 0.0
    %227 = vmatprep.subr.mxu0 0.0
    %228 = vmatpush1.msra.mxu0 0.0
    %229 = vmatprep.subr.mxu0 0.0
    %230 = vmatpush1.msra.mxu0 0.0
    %231 = vmatprep.subr.mxu0 0.0
    %232 = vmatpush1.msra.mxu0 0.0
    %233 = vmatprep.subr.mxu0 0.0
    %234 = vmatpush1.msra.mxu0 0.0
    %235 = vmatprep.subr.mxu0 0.0
    %236 = vmatpush1.msra.mxu0 0.0
    %237 = vmatprep.subr.mxu0 0.0
    %238 = vmatpush1.msra.mxu0 0.0
    %239 = vmatprep.subr.mxu0 0.0
    %240 = vmatpush1.msra.mxu0 0.0
    %241 = vmatprep.subr.mxu0 0.0
    %242 = vmatpush1.msra.mxu0 0.0
    %243 = vmatprep.subr.mxu0 0.0
    %244 = vmatpush1.msra.mxu0 0.0
    %245 = vmatprep.subr.mxu0 0.0
    %246 = vmatpush1.msra.mxu0 0.0
    %247 = vmatprep.subr.mxu0 0.0
    %248 = vmatpush1.msra.mxu0 0.0
    %249 = vmatprep.subr.mxu0 0.0
    %250 = vmatpush1.msra.mxu0 0.0
    %251 = vmatprep.mubr.f32.mxu0 0.0
    %252 = vmatmul.mubr.f32.gmra.mrb[0].mxu0 %v87
    %v253 = vpop.f32.mrb[0].mxu0
    %v254 = vadd.f32 %v68, %v253
    %v255 = vpop.f32.mrb[0].mxu0
    %v256 = vadd.f32 %v68, %v255
    %257 = vmatprep.mubr.f32.mxu0 0.0
    %258 = vmatmul.mubr.f32.gmra.mrb[0].mxu0 %v90
    %v259 = vpop.f32.mrb[0].mxu0
    %v260 = vadd.f32 %v73, %v259
    %v261 = vpop.f32.mrb[0].mxu0
    %v262 = vadd.f32 %v73, %v261
    %263 = vmatprep.mubr.f32.mxu0 0.0
    %264 = vmatmul.mubr.f32.gmra.mrb[0].mxu0 %v93
    %v265 = vpop.f32.mrb[0].mxu0
    %v266 = vadd.f32 %v78, %v265
    %v267 = vpop.f32.mrb[0].mxu0
    %v268 = vadd.f32 %v78, %v267
    %269 = vmatprep.mubr.f32.mxu0 0.0
    %270 = vmatmul.mubr.f32.gmra.mrb[0].mxu0 %v96
    %v271 = vpop.f32.mrb[0].mxu0
    %v272 = vadd.f32 %v83, %v271
    %v273 = vpop.f32.mrb[0].mxu0
    %v274 = vadd.f32 %v83, %v273
    %275 = vdwg.mxu0
    %vm276 = vcmp.ge.f32.partialorder %v165, 0.0
    %vm277 = vcmp.ge.f32.partialorder %v167, 0.0
    %vm278 = vcmp.ge.f32.partialorder %v254, 0.0
    %vm279 = vcmp.ge.f32.partialorder %v256, 0.0
    %vm280 = vcmp.ge.f32.partialorder %v171, 0.0
    %vm281 = vcmp.ge.f32.partialorder %v173, 0.0
    %vm282 = vcmp.ge.f32.partialorder %v260, 0.0
    %vm283 = vcmp.ge.f32.partialorder %v262, 0.0
    %vm284 = vcmp.ge.f32.partialorder %v177, 0.0
    %vm285 = vcmp.ge.f32.partialorder %v179, 0.0
    %vm286 = vcmp.ge.f32.partialorder %v266, 0.0
    %vm287 = vcmp.ge.f32.partialorder %v268, 0.0
    %vm288 = vcmp.ge.f32.partialorder %v183, 0.0
    %vm289 = vcmp.ge.f32.partialorder %v185, 0.0
    %vm290 = vcmp.ge.f32.partialorder %v272, 0.0
    %vm291 = vcmp.ge.f32.partialorder %v274, 0.0
    %292 = vset.pattern.permute.xlu0 1
    %293 = vperm.xlu0 %292, %v55
    %v294 = vpop.permute.xlu0 %293
    %296 = vset.pattern.permute.xlu0 1
    %297 = vperm.xlu0 %296, %v56
    %v298 = vpop.permute.xlu0 %297
    %300 = vset.pattern.permute.xlu0 1
    %301 = vperm.xlu0 %300, %v57
    %v302 = vpop.permute.xlu0 %301
    %304 = vset.pattern.permute.xlu0 1
    %305 = vperm.xlu0 %304, %v58
    %v306 = vpop.permute.xlu0 %305
    %v308 = vmul.f32 %v294, %v165
    %v309 = vmul.f32 %v294, %v167
    %v310 = vmul.f32 %v294, %v254
    %v311 = vmul.f32 %v294, %v256
    %v312 = vmul.f32 %v298, %v171
    %v313 = vmul.f32 %v298, %v173
    %v314 = vmul.f32 %v298, %v260
    %v315 = vmul.f32 %v298, %v262
    %v316 = vmul.f32 %v302, %v177
    %v317 = vmul.f32 %v302, %v179
    %v318 = vmul.f32 %v302, %v266
    %v319 = vmul.f32 %v302, %v268
    %v320 = vmul.f32 %v306, %v183
    %v321 = vmul.f32 %v306, %v185
    %v322 = vmul.f32 %v306, %v272
    %v323 = vmul.f32 %v306, %v274
    %v324 = vsel %vm276, %v165, %v308
    %v325 = vsel %vm277, %v167, %v309
    %v326 = vsel %vm278, %v254, %v310
    %v327 = vsel %vm279, %v256, %v311
    %v328 = vsel %vm280, %v171, %v312
    %v329 = vsel %vm281, %v173, %v313
    %v330 = vsel %vm282, %v260, %v314
    %v331 = vsel %vm283, %v262, %v315
    %v332 = vsel %vm284, %v177, %v316
    %v333 = vsel %vm285, %v179, %v317
    %v334 = vsel %vm286, %v266, %v318
    %v335 = vsel %vm287, %v268, %v319
    %v336 = vsel %vm288, %v183, %v320
    %v337 = vsel %vm289, %v185, %v321
    %v338 = vsel %vm290, %v272, %v322
    %v339 = vsel %vm291, %v274, %v323
    %340 = vrot.lane.b32.xlu0 %v324, 17
    %v341 = vpop.permute.xlu0 %340
    %342 = vrot.lane.b32.xlu0 %v328, 17
    %v343 = vpop.permute.xlu0 %342
    %344 = vrot.lane.b32.xlu0 %v332, 17
    %v345 = vpop.permute.xlu0 %344
    %346 = vrot.lane.b32.xlu0 %v336, 17
    %v347 = vpop.permute.xlu0 %346
    %348 = vrot.lane.b32.xlu0 %v325, 17
    %v349 = vpop.permute.xlu0 %348
    %350 = vrot.lane.b32.xlu0 %v329, 17
    %v351 = vpop.permute.xlu0 %350
    %352 = vrot.lane.b32.xlu0 %v333, 17
    %v353 = vpop.permute.xlu0 %352
    %354 = vrot.lane.b32.xlu0 %v337, 17
    %v355 = vpop.permute.xlu0 %354
    %356 = vrot.lane.b32.xlu0 %v326, 17
    %v357 = vpop.permute.xlu0 %356
    %358 = vrot.lane.b32.xlu0 %v330, 17
    %v359 = vpop.permute.xlu0 %358
    %360 = vrot.lane.b32.xlu0 %v334, 17
    %v361 = vpop.permute.xlu0 %360
    %362 = vrot.lane.b32.xlu0 %v338, 17
    %v363 = vpop.permute.xlu0 %362
    %364 = vrot.lane.b32.xlu0 %v327, 17
    %v365 = vpop.permute.xlu0 %364
    %366 = vrot.lane.b32.xlu0 %v331, 17
    %v367 = vpop.permute.xlu0 %366
    %368 = vrot.lane.b32.xlu0 %v335, 17
    %v369 = vpop.permute.xlu0 %368
    %370 = vrot.lane.b32.xlu0 %v339, 17
    %v371 = vpop.permute.xlu0 %370
    %v372 = vlaneseq
    %v373 = vand.u32 %v372, 127
    %vm374 = vcmp.lt.s32.totalorder %v373, 17
    %v375 = vsel %vm374, %v357, %v365
    %v376 = vsel %vm374, %v359, %v367
    %v377 = vsel %vm374, %v361, %v369
    %v378 = vsel %vm374, %v363, %v371
    %v379 = vsel %vm374, %v349, %v357
    %v380 = vsel %vm374, %v351, %v359
    %v381 = vsel %vm374, %v353, %v361
    %v382 = vsel %vm374, %v355, %v363
    %v383 = vsel %vm374, %v341, %v349
    %v384 = vsel %vm374, %v343, %v351
    %v385 = vsel %vm374, %v345, %v353
    %v386 = vsel %vm374, %v347, %v355
    %v387 = vsel %vm374, %v365, %v341
    %v388 = vsel %vm374, %v367, %v343
    %v389 = vsel %vm374, %v369, %v345
    %v390 = vsel %vm374, %v371, %v347
    %v391 = vld [vmem:[#allocation2] sm:$0xff]
    %v392 = vld [vmem:[#allocation2 + $0x8] sm:$0xff]
    %v393 = vld [vmem:[#allocation2 + $0x10] sm:$0xff]
    %v394 = vld [vmem:[#allocation2 + $0x18] sm:$0xff]
    %v395 = vld [vmem:[#allocation2 + $0x20] sm:$0xff]
    %v396 = vld [vmem:[#allocation2 + $0x28] sm:$0xff]
    %v397 = vld [vmem:[#allocation2 + $0x30] sm:$0xff]
    %v398 = vld [vmem:[#allocation2 + $0x38] sm:$0xff]
    %v399 = vld [vmem:[#allocation2 + $0x40] sm:$0xff]
    %v400 = vld [vmem:[#allocation2 + $0x48] sm:$0xff]
    %v401 = vld [vmem:[#allocation2 + $0x50] sm:$0xff]
    %v402 = vld [vmem:[#allocation2 + $0x58] sm:$0xff]
    %v403 = vld [vmem:[#allocation2 + $0x60] sm:$0xff]
    %v404 = vld [vmem:[#allocation2 + $0x68] sm:$0xff]
    %v405 = vld [vmem:[#allocation2 + $0x70] sm:$0xff]
    %v406 = vld [vmem:[#allocation2 + $0x78] sm:$0xff]
    %v407 = vmul.f32 %v387, %v391
    %v408 = vmul.f32 %v383, %v392
    %v409 = vmul.f32 %v379, %v393
    %v410 = vmul.f32 %v375, %v394
    %v411 = vmul.f32 %v388, %v395
    %v412 = vmul.f32 %v384, %v396
    %v413 = vmul.f32 %v380, %v397
    %v414 = vmul.f32 %v376, %v398
    %v415 = vmul.f32 %v389, %v399
    %v416 = vmul.f32 %v385, %v400
    %v417 = vmul.f32 %v381, %v401
    %v418 = vmul.f32 %v377, %v402
    %v419 = vmul.f32 %v390, %v403
    %v420 = vmul.f32 %v386, %v404
    %v421 = vmul.f32 %v382, %v405
    %v422 = vmul.f32 %v378, %v406
    %423 = vrot.lane.b32.xlu0 %v324, 16
    %v424 = vpop.permute.xlu0 %423
    %425 = vrot.lane.b32.xlu0 %v328, 16
    %v426 = vpop.permute.xlu0 %425
    %427 = vrot.lane.b32.xlu0 %v332, 16
    %v428 = vpop.permute.xlu0 %427
    %429 = vrot.lane.b32.xlu0 %v336, 16
    %v430 = vpop.permute.xlu0 %429
    %431 = vrot.lane.b32.xlu0 %v325, 16
    %v432 = vpop.permute.xlu0 %431
    %433 = vrot.lane.b32.xlu0 %v329, 16
    %v434 = vpop.permute.xlu0 %433
    %435 = vrot.lane.b32.xlu0 %v333, 16
    %v436 = vpop.permute.xlu0 %435
    %437 = vrot.lane.b32.xlu0 %v337, 16
    %v438 = vpop.permute.xlu0 %437
    %439 = vrot.lane.b32.xlu0 %v326, 16
    %v440 = vpop.permute.xlu0 %439
    %441 = vrot.lane.b32.xlu0 %v330, 16
    %v442 = vpop.permute.xlu0 %441
    %443 = vrot.lane.b32.xlu0 %v334, 16
    %v444 = vpop.permute.xlu0 %443
    %445 = vrot.lane.b32.xlu0 %v338, 16
    %v446 = vpop.permute.xlu0 %445
    %447 = vrot.lane.b32.xlu0 %v327, 16
    %v448 = vpop.permute.xlu0 %447
    %449 = vrot.lane.b32.xlu0 %v331, 16
    %v450 = vpop.permute.xlu0 %449
    %451 = vrot.lane.b32.xlu0 %v335, 16
    %v452 = vpop.permute.xlu0 %451
    %453 = vrot.lane.b32.xlu0 %v339, 16
    %v454 = vpop.permute.xlu0 %453
    %vm455 = vcmp.lt.s32.totalorder %v373, 16
    %v456 = vsel %vm455, %v440, %v448
    %v457 = vsel %vm455, %v442, %v450
    %v458 = vsel %vm455, %v444, %v452
    %v459 = vsel %vm455, %v446, %v454
    %v460 = vsel %vm455, %v432, %v440
    %v461 = vsel %vm455, %v434, %v442
    %v462 = vsel %vm455, %v436, %v444
    %v463 = vsel %vm455, %v438, %v446
    %v464 = vsel %vm455, %v424, %v432
    %v465 = vsel %vm455, %v426, %v434
    %v466 = vsel %vm455, %v428, %v436
    %v467 = vsel %vm455, %v430, %v438
    %v468 = vsel %vm455, %v448, %v424
    %v469 = vsel %vm455, %v450, %v426
    %v470 = vsel %vm455, %v452, %v428
    %v471 = vsel %vm455, %v454, %v430
    %s472 = scalar_lea.vmem [#allocation2], 128
    %v473 = vld [vmem:[%s472] sm:$0xff]
    %v474 = vld [vmem:[%s472 + $0x8] sm:$0xff]
    %v475 = vld [vmem:[%s472 + $0x10] sm:$0xff]
    %v476 = vld [vmem:[%s472 + $0x18] sm:$0xff]
    %v477 = vld [vmem:[%s472 + $0x20] sm:$0xff]
    %v478 = vld [vmem:[%s472 + $0x28] sm:$0xff]
    %v479 = vld [vmem:[%s472 + $0x30] sm:$0xff]
    %v480 = vld [vmem:[%s472 + $0x38] sm:$0xff]
    %v481 = vld [vmem:[%s472 + $0x40] sm:$0xff]
    %v482 = vld [vmem:[%s472 + $0x48] sm:$0xff]
    %v483 = vld [vmem:[%s472 + $0x50] sm:$0xff]
    %v484 = vld [vmem:[%s472 + $0x58] sm:$0xff]
    %v485 = vld [vmem:[%s472 + $0x60] sm:$0xff]
    %v486 = vld [vmem:[%s472 + $0x68] sm:$0xff]
    %v487 = vld [vmem:[%s472 + $0x70] sm:$0xff]
    %v488 = vld [vmem:[%s472 + $0x78] sm:$0xff]
    %v489 = vmul.f32 %v468, %v473
    %v490 = vmul.f32 %v464, %v474
    %v491 = vmul.f32 %v460, %v475
    %v492 = vmul.f32 %v456, %v476
    %v493 = vmul.f32 %v469, %v477
    %v494 = vmul.f32 %v465, %v478
    %v495 = vmul.f32 %v461, %v479
    %v496 = vmul.f32 %v457, %v480
    %v497 = vmul.f32 %v470, %v481
    %v498 = vmul.f32 %v466, %v482
    %v499 = vmul.f32 %v462, %v483
    %v500 = vmul.f32 %v458, %v484
    %v501 = vmul.f32 %v471, %v485
    %v502 = vmul.f32 %v467, %v486
    %v503 = vmul.f32 %v463, %v487
    %v504 = vmul.f32 %v459, %v488
    %v505 = vadd.f32 %v407, %v489
    %v506 = vadd.f32 %v408, %v490
    %v507 = vadd.f32 %v409, %v491
    %v508 = vadd.f32 %v410, %v492
    %v509 = vadd.f32 %v411, %v493
    %v510 = vadd.f32 %v412, %v494
    %v511 = vadd.f32 %v413, %v495
    %v512 = vadd.f32 %v414, %v496
    %v513 = vadd.f32 %v415, %v497
    %v514 = vadd.f32 %v416, %v498
    %v515 = vadd.f32 %v417, %v499
    %v516 = vadd.f32 %v418, %v500
    %v517 = vadd.f32 %v419, %v501
    %v518 = vadd.f32 %v420, %v502
    %v519 = vadd.f32 %v421, %v503
    %v520 = vadd.f32 %v422, %v504
    %521 = vrot.lane.b32.xlu0 %v324, 15
    %v522 = vpop.permute.xlu0 %521
    %523 = vrot.lane.b32.xlu0 %v328, 15
    %v524 = vpop.permute.xlu0 %523
    %525 = vrot.lane.b32.xlu0 %v332, 15
    %v526 = vpop.permute.xlu0 %525
    %527 = vrot.lane.b32.xlu0 %v336, 15
    %v528 = vpop.permute.xlu0 %527
    %529 = vrot.lane.b32.xlu0 %v325, 15
    %v530 = vpop.permute.xlu0 %529
    %531 = vrot.lane.b32.xlu0 %v329, 15
    %v532 = vpop.permute.xlu0 %531
    %533 = vrot.lane.b32.xlu0 %v333, 15
    %v534 = vpop.permute.xlu0 %533
    %535 = vrot.lane.b32.xlu0 %v337, 15
    %v536 = vpop.permute.xlu0 %535
    %537 = vrot.lane.b32.xlu0 %v326, 15
    %v538 = vpop.permute.xlu0 %537
    %539 = vrot.lane.b32.xlu0 %v330, 15
    %v540 = vpop.permute.xlu0 %539
    %541 = vrot.lane.b32.xlu0 %v334, 15
    %v542 = vpop.permute.xlu0 %541
    %543 = vrot.lane.b32.xlu0 %v338, 15
    %v544 = vpop.permute.xlu0 %543
    %545 = vrot.lane.b32.xlu0 %v327, 15
    %v546 = vpop.permute.xlu0 %545
    %547 = vrot.lane.b32.xlu0 %v331, 15
    %v548 = vpop.permute.xlu0 %547
    %549 = vrot.lane.b32.xlu0 %v335, 15
    %v550 = vpop.permute.xlu0 %549
    %551 = vrot.lane.b32.xlu0 %v339, 15
    %v552 = vpop.permute.xlu0 %551
    %vm553 = vcmp.lt.s32.totalorder %v373, 15
    %v554 = vsel %vm553, %v538, %v546
    %v555 = vsel %vm553, %v540, %v548
    %v556 = vsel %vm553, %v542, %v550
    %v557 = vsel %vm553, %v544, %v552
    %v558 = vsel %vm553, %v530, %v538
    %v559 = vsel %vm553, %v532, %v540
    %v560 = vsel %vm553, %v534, %v542
    %v561 = vsel %vm553, %v536, %v544
    %v562 = vsel %vm553, %v522, %v530
    %v563 = vsel %vm553, %v524, %v532
    %v564 = vsel %vm553, %v526, %v534
    %v565 = vsel %vm553, %v528, %v536
    %v566 = vsel %vm553, %v546, %v522
    %v567 = vsel %vm553, %v548, %v524
    %v568 = vsel %vm553, %v550, %v526
    %v569 = vsel %vm553, %v552, %v528
    %s570 = scalar_lea.vmem [#allocation2], 256
    %v571 = vld [vmem:[%s570] sm:$0xff]
    %v572 = vld [vmem:[%s570 + $0x8] sm:$0xff]
    %v573 = vld [vmem:[%s570 + $0x10] sm:$0xff]
    %v574 = vld [vmem:[%s570 + $0x18] sm:$0xff]
    %v575 = vld [vmem:[%s570 + $0x20] sm:$0xff]
    %v576 = vld [vmem:[%s570 + $0x28] sm:$0xff]
    %v577 = vld [vmem:[%s570 + $0x30] sm:$0xff]
    %v578 = vld [vmem:[%s570 + $0x38] sm:$0xff]
    %v579 = vld [vmem:[%s570 + $0x40] sm:$0xff]
    %v580 = vld [vmem:[%s570 + $0x48] sm:$0xff]
    %v581 = vld [vmem:[%s570 + $0x50] sm:$0xff]
    %v582 = vld [vmem:[%s570 + $0x58] sm:$0xff]
    %v583 = vld [vmem:[%s570 + $0x60] sm:$0xff]
    %v584 = vld [vmem:[%s570 + $0x68] sm:$0xff]
    %v585 = vld [vmem:[%s570 + $0x70] sm:$0xff]
    %v586 = vld [vmem:[%s570 + $0x78] sm:$0xff]
    %v587 = vmul.f32 %v566, %v571
    %v588 = vmul.f32 %v562, %v572
    %v589 = vmul.f32 %v558, %v573
    %v590 = vmul.f32 %v554, %v574
    %v591 = vmul.f32 %v567, %v575
    %v592 = vmul.f32 %v563, %v576
    %v593 = vmul.f32 %v559, %v577
    %v594 = vmul.f32 %v555, %v578
    %v595 = vmul.f32 %v568, %v579
    %v596 = vmul.f32 %v564, %v580
    %v597 = vmul.f32 %v560, %v581
    %v598 = vmul.f32 %v556, %v582
    %v599 = vmul.f32 %v569, %v583
    %v600 = vmul.f32 %v565, %v584
    %v601 = vmul.f32 %v561, %v585
    %v602 = vmul.f32 %v557, %v586
    %v603 = vadd.f32 %v505, %v587
    %v604 = vadd.f32 %v506, %v588
    %v605 = vadd.f32 %v507, %v589
    %v606 = vadd.f32 %v508, %v590
    %v607 = vadd.f32 %v509, %v591
    %v608 = vadd.f32 %v510, %v592
    %v609 = vadd.f32 %v511, %v593
    %v610 = vadd.f32 %v512, %v594
    %v611 = vadd.f32 %v513, %v595
    %v612 = vadd.f32 %v514, %v596
    %v613 = vadd.f32 %v515, %v597
    %v614 = vadd.f32 %v516, %v598
    %v615 = vadd.f32 %v517, %v599
    %v616 = vadd.f32 %v518, %v600
    %v617 = vadd.f32 %v519, %v601
    %v618 = vadd.f32 %v520, %v602
    %619 = vrot.lane.b32.xlu0 %v324, 1
    %v620 = vpop.permute.xlu0 %619
    %621 = vrot.lane.b32.xlu0 %v328, 1
    %v622 = vpop.permute.xlu0 %621
    %623 = vrot.lane.b32.xlu0 %v332, 1
    %v624 = vpop.permute.xlu0 %623
    %625 = vrot.lane.b32.xlu0 %v336, 1
    %v626 = vpop.permute.xlu0 %625
    %627 = vrot.lane.b32.xlu0 %v325, 1
    %v628 = vpop.permute.xlu0 %627
    %629 = vrot.lane.b32.xlu0 %v329, 1
    %v630 = vpop.permute.xlu0 %629
    %631 = vrot.lane.b32.xlu0 %v333, 1
    %v632 = vpop.permute.xlu0 %631
    %633 = vrot.lane.b32.xlu0 %v337, 1
    %v634 = vpop.permute.xlu0 %633
    %635 = vrot.lane.b32.xlu0 %v326, 1
    %v636 = vpop.permute.xlu0 %635
    %637 = vrot.lane.b32.xlu0 %v330, 1
    %v638 = vpop.permute.xlu0 %637
    %639 = vrot.lane.b32.xlu0 %v334, 1
    %v640 = vpop.permute.xlu0 %639
    %641 = vrot.lane.b32.xlu0 %v338, 1
    %v642 = vpop.permute.xlu0 %641
    %643 = vrot.lane.b32.xlu0 %v327, 1
    %v644 = vpop.permute.xlu0 %643
    %645 = vrot.lane.b32.xlu0 %v331, 1
    %v646 = vpop.permute.xlu0 %645
    %647 = vrot.lane.b32.xlu0 %v335, 1
    %v648 = vpop.permute.xlu0 %647
    %649 = vrot.lane.b32.xlu0 %v339, 1
    %v650 = vpop.permute.xlu0 %649
    %vm651 = vcmp.lt.s32.totalorder %v373, 1
    %v652 = vsel %vm651, %v636, %v644
    %v653 = vsel %vm651, %v638, %v646
    %v654 = vsel %vm651, %v640, %v648
    %v655 = vsel %vm651, %v642, %v650
    %v656 = vsel %vm651, %v628, %v636
    %v657 = vsel %vm651, %v630, %v638
    %v658 = vsel %vm651, %v632, %v640
    %v659 = vsel %vm651, %v634, %v642
    %v660 = vsel %vm651, %v620, %v628
    %v661 = vsel %vm651, %v622, %v630
    %v662 = vsel %vm651, %v624, %v632
    %v663 = vsel %vm651, %v626, %v634
    %v664 = vsel %vm651, %v644, %v620
    %v665 = vsel %vm651, %v646, %v622
    %v666 = vsel %vm651, %v648, %v624
    %v667 = vsel %vm651, %v650, %v626
    %s668 = scalar_lea.vmem [#allocation2], 384
    %v669 = vld [vmem:[%s668] sm:$0xff]
    %v670 = vld [vmem:[%s668 + $0x8] sm:$0xff]
    %v671 = vld [vmem:[%s668 + $0x10] sm:$0xff]
    %v672 = vld [vmem:[%s668 + $0x18] sm:$0xff]
    %v673 = vld [vmem:[%s668 + $0x20] sm:$0xff]
    %v674 = vld [vmem:[%s668 + $0x28] sm:$0xff]
    %v675 = vld [vmem:[%s668 + $0x30] sm:$0xff]
    %v676 = vld [vmem:[%s668 + $0x38] sm:$0xff]
    %v677 = vld [vmem:[%s668 + $0x40] sm:$0xff]
    %v678 = vld [vmem:[%s668 + $0x48] sm:$0xff]
    %v679 = vld [vmem:[%s668 + $0x50] sm:$0xff]
    %v680 = vld [vmem:[%s668 + $0x58] sm:$0xff]
    %v681 = vld [vmem:[%s668 + $0x60] sm:$0xff]
    %v682 = vld [vmem:[%s668 + $0x68] sm:$0xff]
    %v683 = vld [vmem:[%s668 + $0x70] sm:$0xff]
    %v684 = vld [vmem:[%s668 + $0x78] sm:$0xff]
    %v685 = vmul.f32 %v664, %v669
    %v686 = vmul.f32 %v660, %v670
    %v687 = vmul.f32 %v656, %v671
    %v688 = vmul.f32 %v652, %v672
    %v689 = vmul.f32 %v665, %v673
    %v690 = vmul.f32 %v661, %v674
    %v691 = vmul.f32 %v657, %v675
    %v692 = vmul.f32 %v653, %v676
    %v693 = vmul.f32 %v666, %v677
    %v694 = vmul.f32 %v662, %v678
    %v695 = vmul.f32 %v658, %v679
    %v696 = vmul.f32 %v654, %v680
    %v697 = vmul.f32 %v667, %v681
    %v698 = vmul.f32 %v663, %v682
    %v699 = vmul.f32 %v659, %v683
    %v700 = vmul.f32 %v655, %v684
    %v701 = vadd.f32 %v603, %v685
    %v702 = vadd.f32 %v604, %v686
    %v703 = vadd.f32 %v605, %v687
    %v704 = vadd.f32 %v606, %v688
    %v705 = vadd.f32 %v607, %v689
    %v706 = vadd.f32 %v608, %v690
    %v707 = vadd.f32 %v609, %v691
    %v708 = vadd.f32 %v610, %v692
    %v709 = vadd.f32 %v611, %v693
    %v710 = vadd.f32 %v612, %v694
    %v711 = vadd.f32 %v613, %v695
    %v712 = vadd.f32 %v614, %v696
    %v713 = vadd.f32 %v615, %v697
    %v714 = vadd.f32 %v616, %v698
    %v715 = vadd.f32 %v617, %v699
    %v716 = vadd.f32 %v618, %v700
    %s717 = scalar_lea.vmem [#allocation2], 512
    %v718 = vld [vmem:[%s717] sm:$0xff]
    %v719 = vld [vmem:[%s717 + $0x8] sm:$0xff]
    %v720 = vld [vmem:[%s717 + $0x10] sm:$0xff]
    %v721 = vld [vmem:[%s717 + $0x18] sm:$0xff]
    %v722 = vld [vmem:[%s717 + $0x20] sm:$0xff]
    %v723 = vld [vmem:[%s717 + $0x28] sm:$0xff]
    %v724 = vld [vmem:[%s717 + $0x30] sm:$0xff]
    %v725 = vld [vmem:[%s717 + $0x38] sm:$0xff]
    %v726 = vld [vmem:[%s717 + $0x40] sm:$0xff]
    %v727 = vld [vmem:[%s717 + $0x48] sm:$0xff]
    %v728 = vld [vmem:[%s717 + $0x50] sm:$0xff]
    %v729 = vld [vmem:[%s717 + $0x58] sm:$0xff]
    %v730 = vld [vmem:[%s717 + $0x60] sm:$0xff]
    %v731 = vld [vmem:[%s717 + $0x68] sm:$0xff]
    %v732 = vld [vmem:[%s717 + $0x70] sm:$0xff]
    %v733 = vld [vmem:[%s717 + $0x78] sm:$0xff]
    %v734 = vmul.f32 %v324, %v718
    %v735 = vmul.f32 %v325, %v719
    %v736 = vmul.f32 %v326, %v720
    %v737 = vmul.f32 %v327, %v721
    %v738 = vmul.f32 %v328, %v722
    %v739 = vmul.f32 %v329, %v723
    %v740 = vmul.f32 %v330, %v724
    %v741 = vmul.f32 %v331, %v725
    %v742 = vmul.f32 %v332, %v726
    %v743 = vmul.f32 %v333, %v727
    %v744 = vmul.f32 %v334, %v728
    %v745 = vmul.f32 %v335, %v729
    %v746 = vmul.f32 %v336, %v730
    %v747 = vmul.f32 %v337, %v731
    %v748 = vmul.f32 %v338, %v732
    %v749 = vmul.f32 %v339, %v733
    %v750 = vadd.f32 %v701, %v734
    %v751 = vadd.f32 %v702, %v735
    %v752 = vadd.f32 %v703, %v736
    %v753 = vadd.f32 %v704, %v737
    %v754 = vadd.f32 %v705, %v738
    %v755 = vadd.f32 %v706, %v739
    %v756 = vadd.f32 %v707, %v740
    %v757 = vadd.f32 %v708, %v741
    %v758 = vadd.f32 %v709, %v742
    %v759 = vadd.f32 %v710, %v743
    %v760 = vadd.f32 %v711, %v744
    %v761 = vadd.f32 %v712, %v745
    %v762 = vadd.f32 %v713, %v746
    %v763 = vadd.f32 %v714, %v747
    %v764 = vadd.f32 %v715, %v748
    %v765 = vadd.f32 %v716, %v749
    %766 = vrot.lane.b32.xlu0 %v324, 127
    %v767 = vpop.permute.xlu0 %766
    %768 = vrot.lane.b32.xlu0 %v328, 127
    %v769 = vpop.permute.xlu0 %768
    %770 = vrot.lane.b32.xlu0 %v332, 127
    %v771 = vpop.permute.xlu0 %770
    %772 = vrot.lane.b32.xlu0 %v336, 127
    %v773 = vpop.permute.xlu0 %772
    %774 = vrot.lane.b32.xlu0 %v325, 127
    %v775 = vpop.permute.xlu0 %774
    %776 = vrot.lane.b32.xlu0 %v329, 127
    %v777 = vpop.permute.xlu0 %776
    %778 = vrot.lane.b32.xlu0 %v333, 127
    %v779 = vpop.permute.xlu0 %778
    %780 = vrot.lane.b32.xlu0 %v337, 127
    %v781 = vpop.permute.xlu0 %780
    %782 = vrot.lane.b32.xlu0 %v326, 127
    %v783 = vpop.permute.xlu0 %782
    %784 = vrot.lane.b32.xlu0 %v330, 127
    %v785 = vpop.permute.xlu0 %784
    %786 = vrot.lane.b32.xlu0 %v334, 127
    %v787 = vpop.permute.xlu0 %786
    %788 = vrot.lane.b32.xlu0 %v338, 127
    %v789 = vpop.permute.xlu0 %788
    %790 = vrot.lane.b32.xlu0 %v327, 127
    %v791 = vpop.permute.xlu0 %790
    %792 = vrot.lane.b32.xlu0 %v331, 127
    %v793 = vpop.permute.xlu0 %792
    %794 = vrot.lane.b32.xlu0 %v335, 127
    %v795 = vpop.permute.xlu0 %794
    %796 = vrot.lane.b32.xlu0 %v339, 127
    %v797 = vpop.permute.xlu0 %796
    %vm798 = vcmp.lt.s32.totalorder %v373, 127
    %v799 = vsel %vm798, %v783, %v791
    %v800 = vsel %vm798, %v785, %v793
    %v801 = vsel %vm798, %v787, %v795
    %v802 = vsel %vm798, %v789, %v797
    %v803 = vsel %vm798, %v775, %v783
    %v804 = vsel %vm798, %v777, %v785
    %v805 = vsel %vm798, %v779, %v787
    %v806 = vsel %vm798, %v781, %v789
    %v807 = vsel %vm798, %v767, %v775
    %v808 = vsel %vm798, %v769, %v777
    %v809 = vsel %vm798, %v771, %v779
    %v810 = vsel %vm798, %v773, %v781
    %v811 = vsel %vm798, %v791, %v767
    %v812 = vsel %vm798, %v793, %v769
    %v813 = vsel %vm798, %v795, %v771
    %v814 = vsel %vm798, %v797, %v773
    %s815 = scalar_lea.vmem [#allocation2], 640
    %v816 = vld [vmem:[%s815] sm:$0xff]
    %v817 = vld [vmem:[%s815 + $0x8] sm:$0xff]
    %v818 = vld [vmem:[%s815 + $0x10] sm:$0xff]
    %v819 = vld [vmem:[%s815 + $0x18] sm:$0xff]
    %v820 = vld [vmem:[%s815 + $0x20] sm:$0xff]
    %v821 = vld [vmem:[%s815 + $0x28] sm:$0xff]
    %v822 = vld [vmem:[%s815 + $0x30] sm:$0xff]
    %v823 = vld [vmem:[%s815 + $0x38] sm:$0xff]
    %v824 = vld [vmem:[%s815 + $0x40] sm:$0xff]
    %v825 = vld [vmem:[%s815 + $0x48] sm:$0xff]
    %v826 = vld [vmem:[%s815 + $0x50] sm:$0xff]
    %v827 = vld [vmem:[%s815 + $0x58] sm:$0xff]
    %v828 = vld [vmem:[%s815 + $0x60] sm:$0xff]
    %v829 = vld [vmem:[%s815 + $0x68] sm:$0xff]
    %v830 = vld [vmem:[%s815 + $0x70] sm:$0xff]
    %v831 = vld [vmem:[%s815 + $0x78] sm:$0xff]
    %v832 = vmul.f32 %v807, %v816
    %v833 = vmul.f32 %v803, %v817
    %v834 = vmul.f32 %v799, %v818
    %v835 = vmul.f32 %v811, %v819
    %v836 = vmul.f32 %v808, %v820
    %v837 = vmul.f32 %v804, %v821
    %v838 = vmul.f32 %v800, %v822
    %v839 = vmul.f32 %v812, %v823
    %v840 = vmul.f32 %v809, %v824
    %v841 = vmul.f32 %v805, %v825
    %v842 = vmul.f32 %v801, %v826
    %v843 = vmul.f32 %v813, %v827
    %v844 = vmul.f32 %v810, %v828
    %v845 = vmul.f32 %v806, %v829
    %v846 = vmul.f32 %v802, %v830
    %v847 = vmul.f32 %v814, %v831
    %v848 = vadd.f32 %v750, %v832
    %v849 = vadd.f32 %v751, %v833
    %v850 = vadd.f32 %v752, %v834
    %v851 = vadd.f32 %v753, %v835
    %v852 = vadd.f32 %v754, %v836
    %v853 = vadd.f32 %v755, %v837
    %v854 = vadd.f32 %v756, %v838
    %v855 = vadd.f32 %v757, %v839
    %v856 = vadd.f32 %v758, %v840
    %v857 = vadd.f32 %v759, %v841
    %v858 = vadd.f32 %v760, %v842
    %v859 = vadd.f32 %v761, %v843
    %v860 = vadd.f32 %v762, %v844
    %v861 = vadd.f32 %v763, %v845
    %v862 = vadd.f32 %v764, %v846
    %v863 = vadd.f32 %v765, %v847
    %864 = vrot.lane.b32.xlu0 %v324, 113
    %v865 = vpop.permute.xlu0 %864
    %866 = vrot.lane.b32.xlu0 %v328, 113
    %v867 = vpop.permute.xlu0 %866
    %868 = vrot.lane.b32.xlu0 %v332, 113
    %v869 = vpop.permute.xlu0 %868
    %870 = vrot.lane.b32.xlu0 %v336, 113
    %v871 = vpop.permute.xlu0 %870
    %872 = vrot.lane.b32.xlu0 %v325, 113
    %v873 = vpop.permute.xlu0 %872
    %874 = vrot.lane.b32.xlu0 %v329, 113
    %v875 = vpop.permute.xlu0 %874
    %876 = vrot.lane.b32.xlu0 %v333, 113
    %v877 = vpop.permute.xlu0 %876
    %878 = vrot.lane.b32.xlu0 %v337, 113
    %v879 = vpop.permute.xlu0 %878
    %880 = vrot.lane.b32.xlu0 %v326, 113
    %v881 = vpop.permute.xlu0 %880
    %882 = vrot.lane.b32.xlu0 %v330, 113
    %v883 = vpop.permute.xlu0 %882
    %884 = vrot.lane.b32.xlu0 %v334, 113
    %v885 = vpop.permute.xlu0 %884
    %886 = vrot.lane.b32.xlu0 %v338, 113
    %v887 = vpop.permute.xlu0 %886
    %888 = vrot.lane.b32.xlu0 %v327, 113
    %v889 = vpop.permute.xlu0 %888
    %890 = vrot.lane.b32.xlu0 %v331, 113
    %v891 = vpop.permute.xlu0 %890
    %892 = vrot.lane.b32.xlu0 %v335, 113
    %v893 = vpop.permute.xlu0 %892
    %894 = vrot.lane.b32.xlu0 %v339, 113
    %v895 = vpop.permute.xlu0 %894
    %vm896 = vcmp.lt.s32.totalorder %v373, 113
    %v897 = vsel %vm896, %v881, %v889
    %v898 = vsel %vm896, %v883, %v891
    %v899 = vsel %vm896, %v885, %v893
    %v900 = vsel %vm896, %v887, %v895
    %v901 = vsel %vm896, %v873, %v881
    %v902 = vsel %vm896, %v875, %v883
    %v903 = vsel %vm896, %v877, %v885
    %v904 = vsel %vm896, %v879, %v887
    %v905 = vsel %vm896, %v865, %v873
    %v906 = vsel %vm896, %v867, %v875
    %v907 = vsel %vm896, %v869, %v877
    %v908 = vsel %vm896, %v871, %v879
    %v909 = vsel %vm896, %v889, %v865
    %v910 = vsel %vm896, %v891, %v867
    %v911 = vsel %vm896, %v893, %v869
    %v912 = vsel %vm896, %v895, %v871
    %s913 = scalar_lea.vmem [#allocation2], 768
    %v914 = vld [vmem:[%s913] sm:$0xff]
    %v915 = vld [vmem:[%s913 + $0x8] sm:$0xff]
    %v916 = vld [vmem:[%s913 + $0x10] sm:$0xff]
    %v917 = vld [vmem:[%s913 + $0x18] sm:$0xff]
    %v918 = vld [vmem:[%s913 + $0x20] sm:$0xff]
    %v919 = vld [vmem:[%s913 + $0x28] sm:$0xff]
    %v920 = vld [vmem:[%s913 + $0x30] sm:$0xff]
    %v921 = vld [vmem:[%s913 + $0x38] sm:$0xff]
    %v922 = vld [vmem:[%s913 + $0x40] sm:$0xff]
    %v923 = vld [vmem:[%s913 + $0x48] sm:$0xff]
    %v924 = vld [vmem:[%s913 + $0x50] sm:$0xff]
    %v925 = vld [vmem:[%s913 + $0x58] sm:$0xff]
    %v926 = vld [vmem:[%s913 + $0x60] sm:$0xff]
    %v927 = vld [vmem:[%s913 + $0x68] sm:$0xff]
    %v928 = vld [vmem:[%s913 + $0x70] sm:$0xff]
    %v929 = vld [vmem:[%s913 + $0x78] sm:$0xff]
    %v930 = vmul.f32 %v905, %v914
    %v931 = vmul.f32 %v901, %v915
    %v932 = vmul.f32 %v897, %v916
    %v933 = vmul.f32 %v909, %v917
    %v934 = vmul.f32 %v906, %v918
    %v935 = vmul.f32 %v902, %v919
    %v936 = vmul.f32 %v898, %v920
    %v937 = vmul.f32 %v910, %v921
    %v938 = vmul.f32 %v907, %v922
    %v939 = vmul.f32 %v903, %v923
    %v940 = vmul.f32 %v899, %v924
    %v941 = vmul.f32 %v911, %v925
    %v942 = vmul.f32 %v908, %v926
    %v943 = vmul.f32 %v904, %v927
    %v944 = vmul.f32 %v900, %v928
    %v945 = vmul.f32 %v912, %v929
    %v946 = vadd.f32 %v848, %v930
    %v947 = vadd.f32 %v849, %v931
    %v948 = vadd.f32 %v850, %v932
    %v949 = vadd.f32 %v851, %v933
    %v950 = vadd.f32 %v852, %v934
    %v951 = vadd.f32 %v853, %v935
    %v952 = vadd.f32 %v854, %v936
    %v953 = vadd.f32 %v855, %v937
    %v954 = vadd.f32 %v856, %v938
    %v955 = vadd.f32 %v857, %v939
    %v956 = vadd.f32 %v858, %v940
    %v957 = vadd.f32 %v859, %v941
    %v958 = vadd.f32 %v860, %v942
    %v959 = vadd.f32 %v861, %v943
    %v960 = vadd.f32 %v862, %v944
    %v961 = vadd.f32 %v863, %v945
    %962 = vrot.lane.b32.xlu0 %v324, 112
    %v963 = vpop.permute.xlu0 %962
    %964 = vrot.lane.b32.xlu0 %v328, 112
    %v965 = vpop.permute.xlu0 %964
    %966 = vrot.lane.b32.xlu0 %v332, 112
    %v967 = vpop.permute.xlu0 %966
    %968 = vrot.lane.b32.xlu0 %v336, 112
    %v969 = vpop.permute.xlu0 %968
    %970 = vrot.lane.b32.xlu0 %v325, 112
    %v971 = vpop.permute.xlu0 %970
    %972 = vrot.lane.b32.xlu0 %v329, 112
    %v973 = vpop.permute.xlu0 %972
    %974 = vrot.lane.b32.xlu0 %v333, 112
    %v975 = vpop.permute.xlu0 %974
    %976 = vrot.lane.b32.xlu0 %v337, 112
    %v977 = vpop.permute.xlu0 %976
    %978 = vrot.lane.b32.xlu0 %v326, 112
    %v979 = vpop.permute.xlu0 %978
    %980 = vrot.lane.b32.xlu0 %v330, 112
    %v981 = vpop.permute.xlu0 %980
    %982 = vrot.lane.b32.xlu0 %v334, 112
    %v983 = vpop.permute.xlu0 %982
    %984 = vrot.lane.b32.xlu0 %v338, 112
    %v985 = vpop.permute.xlu0 %984
    %986 = vrot.lane.b32.xlu0 %v327, 112
    %v987 = vpop.permute.xlu0 %986
    %988 = vrot.lane.b32.xlu0 %v331, 112
    %v989 = vpop.permute.xlu0 %988
    %990 = vrot.lane.b32.xlu0 %v335, 112
    %v991 = vpop.permute.xlu0 %990
    %992 = vrot.lane.b32.xlu0 %v339, 112
    %v993 = vpop.permute.xlu0 %992
    %vm994 = vcmp.lt.s32.totalorder %v373, 112
    %v995 = vsel %vm994, %v979, %v987
    %v996 = vsel %vm994, %v981, %v989
    %v997 = vsel %vm994, %v983, %v991
    %v998 = vsel %vm994, %v985, %v993
    %v999 = vsel %vm994, %v971, %v979
    %v1000 = vsel %vm994, %v973, %v981
    %v1001 = vsel %vm994, %v975, %v983
    %v1002 = vsel %vm994, %v977, %v985
    %v1003 = vsel %vm994, %v963, %v971
    %v1004 = vsel %vm994, %v965, %v973
    %v1005 = vsel %vm994, %v967, %v975
    %v1006 = vsel %vm994, %v969, %v977
    %v1007 = vsel %vm994, %v987, %v963
    %v1008 = vsel %vm994, %v989, %v965
    %v1009 = vsel %vm994, %v991, %v967
    %v1010 = vsel %vm994, %v993, %v969
    %s1011 = scalar_lea.vmem [#allocation2], 896
    %v1012 = vld [vmem:[%s1011] sm:$0xff]
    %v1013 = vld [vmem:[%s1011 + $0x8] sm:$0xff]
    %v1014 = vld [vmem:[%s1011 + $0x10] sm:$0xff]
    %v1015 = vld [vmem:[%s1011 + $0x18] sm:$0xff]
    %v1016 = vld [vmem:[%s1011 + $0x20] sm:$0xff]
    %v1017 = vld [vmem:[%s1011 + $0x28] sm:$0xff]
    %v1018 = vld [vmem:[%s1011 + $0x30] sm:$0xff]
    %v1019 = vld [vmem:[%s1011 + $0x38] sm:$0xff]
    %v1020 = vld [vmem:[%s1011 + $0x40] sm:$0xff]
    %v1021 = vld [vmem:[%s1011 + $0x48] sm:$0xff]
    %v1022 = vld [vmem:[%s1011 + $0x50] sm:$0xff]
    %v1023 = vld [vmem:[%s1011 + $0x58] sm:$0xff]
    %v1024 = vld [vmem:[%s1011 + $0x60] sm:$0xff]
    %v1025 = vld [vmem:[%s1011 + $0x68] sm:$0xff]
    %v1026 = vld [vmem:[%s1011 + $0x70] sm:$0xff]
    %v1027 = vld [vmem:[%s1011 + $0x78] sm:$0xff]
    %v1028 = vmul.f32 %v1003, %v1012
    %v1029 = vmul.f32 %v999, %v1013
    %v1030 = vmul.f32 %v995, %v1014
    %v1031 = vmul.f32 %v1007, %v1015
    %v1032 = vmul.f32 %v1004, %v1016
    %v1033 = vmul.f32 %v1000, %v1017
    %v1034 = vmul.f32 %v996, %v1018
    %v1035 = vmul.f32 %v1008, %v1019
    %v1036 = vmul.f32 %v1005, %v1020
    %v1037 = vmul.f32 %v1001, %v1021
    %v1038 = vmul.f32 %v997, %v1022
    %v1039 = vmul.f32 %v1009, %v1023
    %v1040 = vmul.f32 %v1006, %v1024
    %v1041 = vmul.f32 %v1002, %v1025
    %v1042 = vmul.f32 %v998, %v1026
    %v1043 = vmul.f32 %v1010, %v1027
    %v1044 = vadd.f32 %v946, %v1028
    %v1045 = vadd.f32 %v947, %v1029
    %v1046 = vadd.f32 %v948, %v1030
    %v1047 = vadd.f32 %v949, %v1031
    %v1048 = vadd.f32 %v950, %v1032
    %v1049 = vadd.f32 %v951, %v1033
    %v1050 = vadd.f32 %v952, %v1034
    %v1051 = vadd.f32 %v953, %v1035
    %v1052 = vadd.f32 %v954, %v1036
    %v1053 = vadd.f32 %v955, %v1037
    %v1054 = vadd.f32 %v956, %v1038
    %v1055 = vadd.f32 %v957, %v1039
    %v1056 = vadd.f32 %v958, %v1040
    %v1057 = vadd.f32 %v959, %v1041
    %v1058 = vadd.f32 %v960, %v1042
    %v1059 = vadd.f32 %v961, %v1043
    %1060 = vrot.lane.b32.xlu0 %v324, 111
    %v1061 = vpop.permute.xlu0 %1060
    %1062 = vrot.lane.b32.xlu0 %v328, 111
    %v1063 = vpop.permute.xlu0 %1062
    %1064 = vrot.lane.b32.xlu0 %v332, 111
    %v1065 = vpop.permute.xlu0 %1064
    %1066 = vrot.lane.b32.xlu0 %v336, 111
    %v1067 = vpop.permute.xlu0 %1066
    %1068 = vrot.lane.b32.xlu0 %v325, 111
    %v1069 = vpop.permute.xlu0 %1068
    %1070 = vrot.lane.b32.xlu0 %v329, 111
    %v1071 = vpop.permute.xlu0 %1070
    %1072 = vrot.lane.b32.xlu0 %v333, 111
    %v1073 = vpop.permute.xlu0 %1072
    %1074 = vrot.lane.b32.xlu0 %v337, 111
    %v1075 = vpop.permute.xlu0 %1074
    %1076 = vrot.lane.b32.xlu0 %v326, 111
    %v1077 = vpop.permute.xlu0 %1076
    %1078 = vrot.lane.b32.xlu0 %v330, 111
    %v1079 = vpop.permute.xlu0 %1078
    %1080 = vrot.lane.b32.xlu0 %v334, 111
    %v1081 = vpop.permute.xlu0 %1080
    %1082 = vrot.lane.b32.xlu0 %v338, 111
    %v1083 = vpop.permute.xlu0 %1082
    %1084 = vrot.lane.b32.xlu0 %v327, 111
    %v1085 = vpop.permute.xlu0 %1084
    %1086 = vrot.lane.b32.xlu0 %v331, 111
    %v1087 = vpop.permute.xlu0 %1086
    %1088 = vrot.lane.b32.xlu0 %v335, 111
    %v1089 = vpop.permute.xlu0 %1088
    %1090 = vrot.lane.b32.xlu0 %v339, 111
    %v1091 = vpop.permute.xlu0 %1090
    %vm1092 = vcmp.lt.s32.totalorder %v373, 111
    %v1093 = vsel %vm1092, %v1077, %v1085
    %v1094 = vsel %vm1092, %v1079, %v1087
    %v1095 = vsel %vm1092, %v1081, %v1089
    %v1096 = vsel %vm1092, %v1083, %v1091
    %v1097 = vsel %vm1092, %v1069, %v1077
    %v1098 = vsel %vm1092, %v1071, %v1079
    %v1099 = vsel %vm1092, %v1073, %v1081
    %v1100 = vsel %vm1092, %v1075, %v1083
    %v1101 = vsel %vm1092, %v1061, %v1069
    %v1102 = vsel %vm1092, %v1063, %v1071
    %v1103 = vsel %vm1092, %v1065, %v1073
    %v1104 = vsel %vm1092, %v1067, %v1075
    %v1105 = vsel %vm1092, %v1085, %v1061
    %v1106 = vsel %vm1092, %v1087, %v1063
    %v1107 = vsel %vm1092, %v1089, %v1065
    %v1108 = vsel %vm1092, %v1091, %v1067
    %s1109 = scalar_lea.vmem [#allocation2], 1024
    %v1110 = vld [vmem:[%s1109] sm:$0xff]
    %v1111 = vld [vmem:[%s1109 + $0x8] sm:$0xff]
    %v1112 = vld [vmem:[%s1109 + $0x10] sm:$0xff]
    %v1113 = vld [vmem:[%s1109 + $0x18] sm:$0xff]
    %v1114 = vld [vmem:[%s1109 + $0x20] sm:$0xff]
    %v1115 = vld [vmem:[%s1109 + $0x28] sm:$0xff]
    %v1116 = vld [vmem:[%s1109 + $0x30] sm:$0xff]
    %v1117 = vld [vmem:[%s1109 + $0x38] sm:$0xff]
    %v1118 = vld [vmem:[%s1109 + $0x40] sm:$0xff]
    %v1119 = vld [vmem:[%s1109 + $0x48] sm:$0xff]
    %v1120 = vld [vmem:[%s1109 + $0x50] sm:$0xff]
    %v1121 = vld [vmem:[%s1109 + $0x58] sm:$0xff]
    %v1122 = vld [vmem:[%s1109 + $0x60] sm:$0xff]
    %v1123 = vld [vmem:[%s1109 + $0x68] sm:$0xff]
    %v1124 = vld [vmem:[%s1109 + $0x70] sm:$0xff]
    %v1125 = vld [vmem:[%s1109 + $0x78] sm:$0xff]
    %v1126 = vmul.f32 %v1101, %v1110
    %v1127 = vmul.f32 %v1097, %v1111
    %v1128 = vmul.f32 %v1093, %v1112
    %v1129 = vmul.f32 %v1105, %v1113
    %v1130 = vmul.f32 %v1102, %v1114
    %v1131 = vmul.f32 %v1098, %v1115
    %v1132 = vmul.f32 %v1094, %v1116
    %v1133 = vmul.f32 %v1106, %v1117
    %v1134 = vmul.f32 %v1103, %v1118
    %v1135 = vmul.f32 %v1099, %v1119
    %v1136 = vmul.f32 %v1095, %v1120
    %v1137 = vmul.f32 %v1107, %v1121
    %v1138 = vmul.f32 %v1104, %v1122
    %v1139 = vmul.f32 %v1100, %v1123
    %v1140 = vmul.f32 %v1096, %v1124
    %v1141 = vmul.f32 %v1108, %v1125
    %v1142 = vadd.f32 %v1044, %v1126
    %v1143 = vadd.f32 %v1045, %v1127
    %v1144 = vadd.f32 %v1046, %v1128
    %v1145 = vadd.f32 %v1047, %v1129
    %v1146 = vadd.f32 %v1048, %v1130
    %v1147 = vadd.f32 %v1049, %v1131
    %v1148 = vadd.f32 %v1050, %v1132
    %v1149 = vadd.f32 %v1051, %v1133
    %v1150 = vadd.f32 %v1052, %v1134
    %v1151 = vadd.f32 %v1053, %v1135
    %v1152 = vadd.f32 %v1054, %v1136
    %v1153 = vadd.f32 %v1055, %v1137
    %v1154 = vadd.f32 %v1056, %v1138
    %v1155 = vadd.f32 %v1057, %v1139
    %v1156 = vadd.f32 %v1058, %v1140
    %v1157 = vadd.f32 %v1059, %v1141
    %1158 = vset.pattern.permute.xlu0 2
    %1159 = vperm.xlu0 %1158, %v55
    %v1160 = vpop.permute.xlu0 %1159
    %1162 = vset.pattern.permute.xlu0 2
    %1163 = vperm.xlu0 %1162, %v56
    %v1164 = vpop.permute.xlu0 %1163
    %1166 = vset.pattern.permute.xlu0 2
    %1167 = vperm.xlu0 %1166, %v57
    %v1168 = vpop.permute.xlu0 %1167
    %1170 = vset.pattern.permute.xlu0 2
    %1171 = vperm.xlu0 %1170, %v58
    %v1172 = vpop.permute.xlu0 %1171
    %v1174 = vadd.f32 %v1142, %v1160
    %v1175 = vadd.f32 %v1143, %v1160
    %v1176 = vadd.f32 %v1144, %v1160
    %v1177 = vadd.f32 %v1145, %v1160
    %v1178 = vadd.f32 %v1146, %v1164
    %v1179 = vadd.f32 %v1147, %v1164
    %v1180 = vadd.f32 %v1148, %v1164
    %v1181 = vadd.f32 %v1149, %v1164
    %v1182 = vadd.f32 %v1150, %v1168
    %v1183 = vadd.f32 %v1151, %v1168
    %v1184 = vadd.f32 %v1152, %v1168
    %v1185 = vadd.f32 %v1153, %v1168
    %v1186 = vadd.f32 %v1154, %v1172
    %v1187 = vadd.f32 %v1155, %v1172
    %v1188 = vadd.f32 %v1156, %v1172
    %v1189 = vadd.f32 %v1157, %v1172
    %vm1190 = vcmp.ge.f32.partialorder %v1174, 0.0
    %vm1191 = vcmp.ge.f32.partialorder %v1175, 0.0
    %vm1192 = vcmp.ge.f32.partialorder %v1176, 0.0
    %vm1193 = vcmp.ge.f32.partialorder %v1177, 0.0
    %vm1194 = vcmp.ge.f32.partialorder %v1178, 0.0
    %vm1195 = vcmp.ge.f32.partialorder %v1179, 0.0
    %vm1196 = vcmp.ge.f32.partialorder %v1180, 0.0
    %vm1197 = vcmp.ge.f32.partialorder %v1181, 0.0
    %vm1198 = vcmp.ge.f32.partialorder %v1182, 0.0
    %vm1199 = vcmp.ge.f32.partialorder %v1183, 0.0
    %vm1200 = vcmp.ge.f32.partialorder %v1184, 0.0
    %vm1201 = vcmp.ge.f32.partialorder %v1185, 0.0
    %vm1202 = vcmp.ge.f32.partialorder %v1186, 0.0
    %vm1203 = vcmp.ge.f32.partialorder %v1187, 0.0
    %vm1204 = vcmp.ge.f32.partialorder %v1188, 0.0
    %vm1205 = vcmp.ge.f32.partialorder %v1189, 0.0
    %1206 = vset.pattern.permute.xlu0 3
    %1207 = vperm.xlu0 %1206, %v55
    %v1208 = vpop.permute.xlu0 %1207
    %1210 = vset.pattern.permute.xlu0 3
    %1211 = vperm.xlu0 %1210, %v56
    %v1212 = vpop.permute.xlu0 %1211
    %1214 = vset.pattern.permute.xlu0 3
    %1215 = vperm.xlu0 %1214, %v57
    %v1216 = vpop.permute.xlu0 %1215
    %1218 = vset.pattern.permute.xlu0 3
    %1219 = vperm.xlu0 %1218, %v58
    %v1220 = vpop.permute.xlu0 %1219
    %v1222 = vmul.f32 %v1208, %v1174
    %v1223 = vmul.f32 %v1208, %v1175
    %v1224 = vmul.f32 %v1208, %v1176
    %v1225 = vmul.f32 %v1208, %v1177
    %v1226 = vmul.f32 %v1212, %v1178
    %v1227 = vmul.f32 %v1212, %v1179
    %v1228 = vmul.f32 %v1212, %v1180
    %v1229 = vmul.f32 %v1212, %v1181
    %v1230 = vmul.f32 %v1216, %v1182
    %v1231 = vmul.f32 %v1216, %v1183
    %v1232 = vmul.f32 %v1216, %v1184
    %v1233 = vmul.f32 %v1216, %v1185
    %v1234 = vmul.f32 %v1220, %v1186
    %v1235 = vmul.f32 %v1220, %v1187
    %v1236 = vmul.f32 %v1220, %v1188
    %v1237 = vmul.f32 %v1220, %v1189
    %v1238 = vsel %vm1190, %v1174, %v1222
    %v1239 = vsel %vm1191, %v1175, %v1223
    %v1240 = vsel %vm1192, %v1176, %v1224
    %v1241 = vsel %vm1193, %v1177, %v1225
    %v1242 = vsel %vm1194, %v1178, %v1226
    %v1243 = vsel %vm1195, %v1179, %v1227
    %v1244 = vsel %vm1196, %v1180, %v1228
    %v1245 = vsel %vm1197, %v1181, %v1229
    %v1246 = vsel %vm1198, %v1182, %v1230
    %v1247 = vsel %vm1199, %v1183, %v1231
    %v1248 = vsel %vm1200, %v1184, %v1232
    %v1249 = vsel %vm1201, %v1185, %v1233
    %v1250 = vsel %vm1202, %v1186, %v1234
    %v1251 = vsel %vm1203, %v1187, %v1235
    %v1252 = vsel %vm1204, %v1188, %v1236
    %v1253 = vsel %vm1205, %v1189, %v1237
    %v1254 = vld [vmem:[%s4] sm:$0xff]
    %v1255 = vld [vmem:[%s4 + $0x8] sm:$0xff]
    %1257 = vset.pattern.permute.xlu0 0
    %1258 = vperm.xlu0 %1257, %v59
    %v1259 = vpop.permute.xlu0 %1258
    %1262 = vset.pattern.permute.xlu0 0
    %1263 = vperm.xlu0 %1262, %v60
    %v1264 = vpop.permute.xlu0 %1263
    %vm1266 = vcmask 261120
    %v1268 = vsel %vm1266, %v1254, 0
    %v1271 = vsel %vm1266, %v1255, 0
    %1273 = vmatprep.subr.mxu0 %v1239
    %1274 = vmatpush1.msra.mxu0 %v1238
    %1275 = vmatprep.subr.mxu0 %v1243
    %1276 = vmatpush1.msra.mxu0 %v1242
    %1277 = vmatprep.subr.mxu0 %v1247
    %1278 = vmatpush1.msra.mxu0 %v1246
    %1279 = vmatprep.subr.mxu0 %v1251
    %1280 = vmatpush1.msra.mxu0 %v1250
    %1281 = vmatprep.subr.mxu0 0.0
    %1282 = vmatpush1.msra.mxu0 0.0
    %1283 = vmatprep.subr.mxu0 0.0
    %1284 = vmatpush1.msra.mxu0 0.0
    %1285 = vmatprep.subr.mxu0 0.0
    %1286 = vmatpush1.msra.mxu0 0.0
    %1287 = vmatprep.subr.mxu0 0.0
    %1288 = vmatpush1.msra.mxu0 0.0
    %1289 = vmatprep.subr.mxu0 0.0
    %1290 = vmatpush1.msra.mxu0 0.0
    %1291 = vmatprep.subr.mxu0 0.0
    %1292 = vmatpush1.msra.mxu0 0.0
    %1293 = vmatprep.subr.mxu0 0.0
    %1294 = vmatpush1.msra.mxu0 0.0
    %1295 = vmatprep.subr.mxu0 0.0
    %1296 = vmatpush1.msra.mxu0 0.0
    %1297 = vmatprep.subr.mxu0 0.0
    %1298 = vmatpush1.msra.mxu0 0.0
    %1299 = vmatprep.subr.mxu0 0.0
    %1300 = vmatpush1.msra.mxu0 0.0
    %1301 = vmatprep.subr.mxu0 0.0
    %1302 = vmatpush1.msra.mxu0 0.0
    %1303 = vmatprep.subr.mxu0 0.0
    %1304 = vmatpush1.msra.mxu0 0.0
    %1305 = vmatprep.subr.mxu0 0.0
    %1306 = vmatpush1.msra.mxu0 0.0
    %1307 = vmatprep.subr.mxu0 0.0
    %1308 = vmatpush1.msra.mxu0 0.0
    %1309 = vmatprep.subr.mxu0 0.0
    %1310 = vmatpush1.msra.mxu0 0.0
    %1311 = vmatprep.subr.mxu0 0.0
    %1312 = vmatpush1.msra.mxu0 0.0
    %1313 = vmatprep.subr.mxu0 0.0
    %1314 = vmatpush1.msra.mxu0 0.0
    %1315 = vmatprep.subr.mxu0 0.0
    %1316 = vmatpush1.msra.mxu0 0.0
    %1317 = vmatprep.subr.mxu0 0.0
    %1318 = vmatpush1.msra.mxu0 0.0
    %1319 = vmatprep.subr.mxu0 0.0
    %1320 = vmatpush1.msra.mxu0 0.0
    %1321 = vmatprep.subr.mxu0 0.0
    %1322 = vmatpush1.msra.mxu0 0.0
    %1323 = vmatprep.subr.mxu0 0.0
    %1324 = vmatpush1.msra.mxu0 0.0
    %1325 = vmatprep.subr.mxu0 0.0
    %1326 = vmatpush1.msra.mxu0 0.0
    %1327 = vmatprep.subr.mxu0 0.0
    %1328 = vmatpush1.msra.mxu0 0.0
    %1329 = vmatprep.subr.mxu0 0.0
    %1330 = vmatpush1.msra.mxu0 0.0
    %1331 = vmatprep.subr.mxu0 0.0
    %1332 = vmatpush1.msra.mxu0 0.0
    %1333 = vmatprep.subr.mxu0 0.0
    %1334 = vmatpush1.msra.mxu0 0.0
    %1335 = vmatprep.subr.mxu0 0.0
    %1336 = vmatpush1.msra.mxu0 0.0
    %1337 = vmatprep.mubr.f32.mxu0 0.0
    %1338 = vmatmul.mubr.f32.gmra.mrb[0].mxu0 %v1268
    %v1339 = vpop.f32.mrb[0].mxu0
    %v1340 = vadd.f32 %v1259, %v1339
    %v1341 = vpop.f32.mrb[0].mxu0
    %v1342 = vadd.f32 %v1259, %v1341
    %1343 = vmatprep.mubr.f32.mxu0 0.0
    %1344 = vmatmul.mubr.f32.gmra.mrb[0].mxu0 %v1271
    %v1345 = vpop.f32.mrb[0].mxu0
    %v1346 = vadd.f32 %v1264, %v1345
    %v1347 = vpop.f32.mrb[0].mxu0
    %v1348 = vadd.f32 %v1264, %v1347
    %1349 = vdwg.mxu0
    %1350 = vmatprep.subr.mxu0 %v1241
    %1351 = vmatpush1.msra.mxu0 %v1240
    %1352 = vmatprep.subr.mxu0 %v1245
    %1353 = vmatpush1.msra.mxu0 %v1244
    %1354 = vmatprep.subr.mxu0 %v1249
    %1355 = vmatpush1.msra.mxu0 %v1248
    %1356 = vmatprep.subr.mxu0 %v1253
    %1357 = vmatpush1.msra.mxu0 %v1252
    %1358 = vmatprep.subr.mxu0 0.0
    %1359 = vmatpush1.msra.mxu0 0.0
    %1360 = vmatprep.subr.mxu0 0.0
    %1361 = vmatpush1.msra.mxu0 0.0
    %1362 = vmatprep.subr.mxu0 0.0
    %1363 = vmatpush1.msra.mxu0 0.0
    %1364 = vmatprep.subr.mxu0 0.0
    %1365 = vmatpush1.msra.mxu0 0.0
    %1366 = vmatprep.subr.mxu0 0.0
    %1367 = vmatpush1.msra.mxu0 0.0
    %1368 = vmatprep.subr.mxu0 0.0
    %1369 = vmatpush1.msra.mxu0 0.0
    %1370 = vmatprep.subr.mxu0 0.0
    %1371 = vmatpush1.msra.mxu0 0.0
    %1372 = vmatprep.subr.mxu0 0.0
    %1373 = vmatpush1.msra.mxu0 0.0
    %1374 = vmatprep.subr.mxu0 0.0
    %1375 = vmatpush1.msra.mxu0 0.0
    %1376 = vmatprep.subr.mxu0 0.0
    %1377 = vmatpush1.msra.mxu0 0.0
    %1378 = vmatprep.subr.mxu0 0.0
    %1379 = vmatpush1.msra.mxu0 0.0
    %1380 = vmatprep.subr.mxu0 0.0
    %1381 = vmatpush1.msra.mxu0 0.0
    %1382 = vmatprep.subr.mxu0 0.0
    %1383 = vmatpush1.msra.mxu0 0.0
    %1384 = vmatprep.subr.mxu0 0.0
    %1385 = vmatpush1.msra.mxu0 0.0
    %1386 = vmatprep.subr.mxu0 0.0
    %1387 = vmatpush1.msra.mxu0 0.0
    %1388 = vmatprep.subr.mxu0 0.0
    %1389 = vmatpush1.msra.mxu0 0.0
    %1390 = vmatprep.subr.mxu0 0.0
    %1391 = vmatpush1.msra.mxu0 0.0
    %1392 = vmatprep.subr.mxu0 0.0
    %1393 = vmatpush1.msra.mxu0 0.0
    %1394 = vmatprep.subr.mxu0 0.0
    %1395 = vmatpush1.msra.mxu0 0.0
    %1396 = vmatprep.subr.mxu0 0.0
    %1397 = vmatpush1.msra.mxu0 0.0
    %1398 = vmatprep.subr.mxu0 0.0
    %1399 = vmatpush1.msra.mxu0 0.0
    %1400 = vmatprep.subr.mxu0 0.0
    %1401 = vmatpush1.msra.mxu0 0.0
    %1402 = vmatprep.subr.mxu0 0.0
    %1403 = vmatpush1.msra.mxu0 0.0
    %1404 = vmatprep.subr.mxu0 0.0
    %1405 = vmatpush1.msra.mxu0 0.0
    %1406 = vmatprep.subr.mxu0 0.0
    %1407 = vmatpush1.msra.mxu0 0.0
    %1408 = vmatprep.subr.mxu0 0.0
    %1409 = vmatpush1.msra.mxu0 0.0
    %1410 = vmatprep.subr.mxu0 0.0
    %1411 = vmatpush1.msra.mxu0 0.0
    %1412 = vmatprep.subr.mxu0 0.0
    %1413 = vmatpush1.msra.mxu0 0.0
    %1414 = vmatprep.mubr.f32.mxu0 0.0
    %1415 = vmatmul.mubr.f32.gmra.mrb[0].mxu0 %v1268
    %v1416 = vpop.f32.mrb[0].mxu0
    %v1417 = vadd.f32 %v1259, %v1416
    %v1418 = vpop.f32.mrb[0].mxu0
    %v1419 = vadd.f32 %v1259, %v1418
    %1420 = vmatprep.mubr.f32.mxu0 0.0
    %1421 = vmatmul.mubr.f32.gmra.mrb[0].mxu0 %v1271
    %v1422 = vpop.f32.mrb[0].mxu0
    %v1423 = vadd.f32 %v1264, %v1422
    %v1424 = vpop.f32.mrb[0].mxu0
    %v1425 = vadd.f32 %v1264, %v1424
    %1426 = vdwg.mxu0
    %v1427 = vld [vmem:[%s6] sm:$0xff]
    %v1428 = vld [vmem:[%s6 + $0x8] sm:$0xff]
    %v1429 = vld [vmem:[%s8] sm:$0xff]
    %v1430 = vld [vmem:[%s8 + $0x8] sm:$0xff]
    %v1431 = vld [vmem:[%s7] sm:$0x1]
    %v1432 = vadd.f32 %v1340, %v1342
    %1433 = vadd.xlane.f32.xlu0 %v1432
    %v1434 = vpop.xlane.xlu0 %1433
    %v1435 = vadd.f32 %v1346, %v1348
    %1436 = vadd.xlane.f32.xlu0 %v1435
    %v1437 = vpop.xlane.xlu0 %1436
    %v1438 = vrcp.pop 256.0
    %v1439 = vmul.f32 %v1434, %v1438
    %v1440 = vmul.f32 %v1437, %v1438
    %v1441 = vmul.f32 %v1427, %v1439
    %v1442 = vmul.f32 %v1428, %v1440
    %vm1443 = vcmask 15360
    %v1444 = vsel %vm1443, %v1441, 0.0
    %v1445 = vsel %vm1443, %v1442, 0.0
    %v1446 = vadd.f32 %v1444, %v1445
    %v1447 = vrot.slane %v1446, 4
    %v1448 = vadd.f32 %v1446, %v1447
    %v1449 = vrot.slane %v1448, 2
    %v1450 = vadd.f32 %v1448, %v1449
    %v1451 = vrot.slane %v1450, 1
    %v1452 = vadd.f32 %v1450, %v1451
    %v1453 = vadd.f32 %v1452, %v1431
    %v1454 = vmax.f32 %v1453, 0.0
    %v1455 = vlaneseq
    %v1456 = vshrl.u32 %v1455, 7
    %v1457 = vsub.s32 0, %v1456
    %v1458 = vrot.slane %v1454, %v1457
    %v1459 = vmul.f32 %v1429, %v1458
    %v1460 = vmul.f32 %v1430, %v1458
    %v1461 = vsel %vm1443, %v1459, 0.0
    %1462 = vadd.xlane.f32.xlu0 %v1461
    %v1463 = vpop.xlane.xlu0 %1462
    %v1464 = vsel %vm1443, %v1460, 0.0
    %1465 = vadd.xlane.f32.xlu0 %v1464
    %v1466 = vpop.xlane.xlu0 %1465
    %v1467 = vadd.f32 %v1463, %v59
    %v1468 = vadd.f32 %v1466, %v60
    %v1469 = vxor.u32 %v1467, 2147483648
    %v1470 = vxor.u32 %v1468, 2147483648
    %v1471 = vmul.f32 %v1469, 1.442695
    %v1472 = vpow.pop %v1471
    %v1473 = vmul.f32 %v1470, 1.442695
    %v1474 = vpow.pop %v1473
    %v1475 = vadd.f32 %v1472, 1.0
    %v1476 = vadd.f32 %v1474, 1.0
    %v1477 = vrcp.pop %v1475
    %v1478 = vmul.f32 1.0, %v1477
    %v1479 = vrcp.pop %v1476
    %v1480 = vmul.f32 1.0, %v1479
    %1482 = vset.pattern.permute.xlu0 1
    %1483 = vperm.xlu0 %1482, %v1478
    %v1484 = vpop.permute.xlu0 %1483
    %1487 = vset.pattern.permute.xlu0 1
    %1488 = vperm.xlu0 %1487, %v1480
    %v1489 = vpop.permute.xlu0 %1488
    %v1491 = vmul.f32 %v1340, %v1484
    %v1492 = vmul.f32 %v1342, %v1484
    %v1493 = vmul.f32 %v1346, %v1489
    %v1494 = vmul.f32 %v1348, %v1489
    %v1495 = vadd.f32 %v47, %v1491
    %v1496 = vadd.f32 %v48, %v1492
    %v1497 = vadd.f32 %v51, %v1493
    %v1498 = vadd.f32 %v52, %v1494
    %1499 = vst [vmem:[#allocation5] sm:$0xff] %v1495
    %1500 = vst [vmem:[#allocation5 + $0x8] sm:$0xff] %v1496
    %1501 = vst [vmem:[#allocation5 + $0x20] sm:$0xff] %v1497
    %1502 = vst [vmem:[#allocation5 + $0x28] sm:$0xff] %v1498
    %v1503 = vadd.f32 %v1417, %v1419
    %1504 = vadd.xlane.f32.xlu0 %v1503
    %v1505 = vpop.xlane.xlu0 %1504
    %v1506 = vadd.f32 %v1423, %v1425
    %1507 = vadd.xlane.f32.xlu0 %v1506
    %v1508 = vpop.xlane.xlu0 %1507
    %v1509 = vmul.f32 %v1505, %v1438
    %v1510 = vmul.f32 %v1508, %v1438
    %v1511 = vmul.f32 %v1427, %v1509
    %v1512 = vmul.f32 %v1428, %v1510
    %v1513 = vsel %vm1443, %v1511, 0.0
    %v1514 = vsel %vm1443, %v1512, 0.0
    %v1515 = vadd.f32 %v1513, %v1514
    %v1516 = vrot.slane %v1515, 4
    %v1517 = vadd.f32 %v1515, %v1516
    %v1518 = vrot.slane %v1517, 2
    %v1519 = vadd.f32 %v1517, %v1518
    %v1520 = vrot.slane %v1519, 1
    %v1521 = vadd.f32 %v1519, %v1520
    %v1522 = vadd.f32 %v1521, %v1431
    %v1523 = vmax.f32 %v1522, 0.0
    %v1524 = vlaneseq
    %v1525 = vshrl.u32 %v1524, 7
    %v1526 = vsub.s32 0, %v1525
    %v1527 = vrot.slane %v1523, %v1526
    %v1528 = vmul.f32 %v1429, %v1527
    %v1529 = vmul.f32 %v1430, %v1527
    %v1530 = vsel %vm1443, %v1528, 0.0
    %1531 = vadd.xlane.f32.xlu0 %v1530
    %v1532 = vpop.xlane.xlu0 %1531
    %v1533 = vsel %vm1443, %v1529, 0.0
    %1534 = vadd.xlane.f32.xlu0 %v1533
    %v1535 = vpop.xlane.xlu0 %1534
    %v1536 = vadd.f32 %v1532, %v59
    %v1537 = vadd.f32 %v1535, %v60
    %v1538 = vxor.u32 %v1536, 2147483648
    %v1539 = vxor.u32 %v1537, 2147483648
    %v1540 = vmul.f32 %v1538, 1.442695
    %v1541 = vpow.pop %v1540
    %v1542 = vmul.f32 %v1539, 1.442695
    %v1543 = vpow.pop %v1542
    %v1544 = vadd.f32 %v1541, 1.0
    %v1545 = vadd.f32 %v1543, 1.0
    %v1546 = vrcp.pop %v1544
    %v1547 = vmul.f32 1.0, %v1546
    %v1548 = vrcp.pop %v1545
    %v1549 = vmul.f32 1.0, %v1548
    %1551 = vset.pattern.permute.xlu0 1
    %1552 = vperm.xlu0 %1551, %v1547
    %v1553 = vpop.permute.xlu0 %1552
    %1556 = vset.pattern.permute.xlu0 1
    %1557 = vperm.xlu0 %1556, %v1549
    %v1558 = vpop.permute.xlu0 %1557
    %v1560 = vmul.f32 %v1417, %v1553
    %v1561 = vmul.f32 %v1419, %v1553
    %v1562 = vmul.f32 %v1423, %v1558
    %v1563 = vmul.f32 %v1425, %v1558
    %v1564 = vadd.f32 %v49, %v1560
    %v1565 = vadd.f32 %v50, %v1561
    %v1566 = vadd.f32 %v53, %v1562
    %v1567 = vadd.f32 %v54, %v1563
    %1568 = vst [vmem:[#allocation5 + $0x10] sm:$0xff] %v1564
    %1569 = vst [vmem:[#allocation5 + $0x18] sm:$0xff] %v1565
    %1570 = vst [vmem:[#allocation5 + $0x30] sm:$0xff] %v1566
    %1571 = vst [vmem:[#allocation5 + $0x38] sm:$0xff] %v1567
    // Predicated region
    $region42: #{tpu_custom_call.1} parent=1 // pred_check
      _
    $region43: #{tpu_custom_call.1} parent=1 // pred_check_branch
      %1573 = sbr.rel (0) target = $region45
    $region44: #{tpu_custom_call.1} parent=1 // pred_region
      %s1575 = ssub.s32 1024, 1024
      %1576 = vsyncadd [#allocation4], %s1575
      %s1577 = sshll.u32 [#allocation5], 4
      %s1578 = int_to_ptr.vmem [resolvable:$true] %s1577
      %1583 = dma.vmem_to_hbm [thread:$0]  %s1578, 1024, %s9, [#allocation4], 512, 512, 32
    $region45: #{tpu_custom_call.1} parent=1 // pred_fallthru
      _
    // Predicated region
    $region46: #{tpu_custom_call.1} parent=1 // pred_check
      _
    $region47: #{tpu_custom_call.1} parent=1 // pred_check_branch
      %1585 = sbr.rel (0) target = $region49
    $region48: #{tpu_custom_call.1} parent=1 // pred_region
      %1586 = dma.done [#allocation4], 1024
    $region49: #{tpu_custom_call.1} parent=1 // pred_fallthru
      _
    %1587 = vsyncpa [#allocation3], 1
    %1588 = vsyncpa [#allocation4], 1

</llo_original>
